<compile_context>
chip_gen: v5e
topology: v5e:2x2
jax: 0.10.0
libtpu: 0.0.40
codegen_flags: <defaults>
</compile_context>

<pallas_src>
import jax
import jax.numpy as jnp
from jax.experimental import pallas as pl
from jax.experimental.pallas import tpu as pltpu

NPAD = 128   # lane-dense padded class dimension (classes 0..9 valid)
TB = 128     # batch tile (128 saturates v5e MXU rows; 256 also fine on v6e/v7x)


def mlp_kernel(x_ref, w1_ref, b1_ref, w2_ref, b2_ref, w3_ref, b3_ref, o_ref):
    x = x_ref[...]                                                     # (TB, 784) bf16

    # hidden1 + ReLU  (bf16 operands, f32 accumulation)
    h1 = jnp.dot(x, w1_ref[...], preferred_element_type=jnp.float32) + b1_ref[...]
    h1 = jnp.maximum(h1, 0.0).astype(jnp.bfloat16)                     # (TB, 128)

    # hidden2 + ReLU
    h2 = jnp.dot(h1, w2_ref[...], preferred_element_type=jnp.float32) + b2_ref[...]
    h2 = jnp.maximum(h2, 0.0).astype(jnp.bfloat16)                     # (TB, 64)

    # output + softmax over class dim.  Padded classes have bias -1e30 and zero
    # weight columns, so exp(...) == 0 there and the 128-lane softmax equals the
    # 10-class softmax.
    logits = jnp.dot(h2, w3_ref[...], preferred_element_type=jnp.float32) + b3_ref[...]  # (TB, 128)
    m = jnp.max(logits, axis=-1, keepdims=True)
    e = jnp.exp(logits - m)
    denom = jnp.sum(e, axis=-1, keepdims=True)
    o_ref[...] = e * pl.reciprocal(denom, approx=True)


def network_forward(x, params, *, tb=TB):
    """x: (B, 784) float32 -> (B, 10) float32 softmax probabilities."""
    w1, b1, w2, b2, w3, b3 = params                 # f32, shapes (in,out)/(1,out)
    B = x.shape[0]

    # bf16 operands for the MXU; biases stay f32 (added to the f32 accumulator).
    xb = x.astype(jnp.bfloat16)
    w1b = w1.astype(jnp.bfloat16)
    w2b = w2.astype(jnp.bfloat16)

    # Lane-dense class dim: pad W3 columns with zeros, pad b3 with -1e30.
    w3p = jnp.zeros((w3.shape[0], NPAD), jnp.bfloat16).at[:, :10].set(w3.astype(jnp.bfloat16))
    b3p = jnp.full((1, NPAD), -1e30, jnp.float32).at[:, :10].set(b3)

    # Pad batch to a multiple of the tile (padded rows are sliced off at the end).
    n_tiles = pl.cdiv(B, tb)
    Bp = n_tiles * tb
    if Bp != B:
        xb = jnp.pad(xb, ((0, Bp - B), (0, 0)))

    out = pl.pallas_call(
        mlp_kernel,
        out_shape=jax.ShapeDtypeStruct((Bp, NPAD), jnp.float32),
        grid=(n_tiles,),
        in_specs=[
            pl.BlockSpec((tb, 784), lambda i: (i, 0)),       # x: tiled over batch
            pl.BlockSpec((784, 128), lambda i: (0, 0)),      # weights/biases: resident
            pl.BlockSpec((1, 128), lambda i: (0, 0)),
            pl.BlockSpec((128, 64), lambda i: (0, 0)),
            pl.BlockSpec((1, 64), lambda i: (0, 0)),
            pl.BlockSpec((64, NPAD), lambda i: (0, 0)),
            pl.BlockSpec((1, NPAD), lambda i: (0, 0)),
        ],
        out_specs=pl.BlockSpec((tb, NPAD), lambda i: (i, 0)),
        compiler_params=pltpu.CompilerParams(
            dimension_semantics=("parallel",),   # shard batch tiles across TCs (v7x)
            vmem_limit_bytes=16 << 20,
        ),
    )(xb, w1b, b1, w2b, b2, w3p, b3p)

    return out[:B, :10]


def init_params(key):
    """Deterministic init mirroring nn.Linear default: U(-1/sqrt(fan_in), 1/sqrt(fan_in))."""
    dims = [(784, 128), (128, 64), (64, 10)]
    params = []
    for (fan_in, fan_out) in dims:
        key, kw, kb = jax.random.split(key, 3)
        bound = 1.0 / jnp.sqrt(fan_in)
        w = jax.random.uniform(kw, (fan_in, fan_out), jnp.float32, -bound, bound)
        b = jax.random.uniform(kb, (1, fan_out), jnp.float32, -bound, bound)
        params += [w, b]
    return tuple(params)


if __name__ == "__main__":
    key = jax.random.PRNGKey(0)
    key, kx = jax.random.split(key)

    B = 200  # not a multiple of TB on purpose: exercises batch padding + 2 grid steps
    x = jax.random.normal(kx, (B, 784), jnp.float32)
    params = init_params(key)

    out = network_forward(x, params)
    out = jax.block_until_ready(out)

    # Reference check in plain JAX (f32).  Kernel uses bf16 operands with f32
    # accumulation, so tolerances are loosened accordingly.
    w1, b1, w2, b2, w3, b3 = params
    h1 = jnp.maximum(x @ w1 + b1, 0.0)
    h2 = jnp.maximum(h1 @ w2 + b2, 0.0)
    ref = jax.nn.softmax(h2 @ w3 + b3, axis=1)

    assert out.shape == (B, 10)
    assert jnp.allclose(out, ref, atol=2e-2), float(jnp.max(jnp.abs(out - ref)))
    assert jnp.allclose(jnp.sum(out, axis=1), 1.0, atol=1e-2)

    print("KERNEL_OK")
</pallas_src>

<mosaic_0001>
module attributes {stable_mosaic.version = 11 : i64} {
  func.func @mlp_kernel(%arg0: i32, %arg1: memref<128x784xbf16, #tpu.memory_space<vmem>>, %arg2: memref<784x128xbf16, #tpu.memory_space<vmem>>, %arg3: memref<1x128xf32, #tpu.memory_space<vmem>>, %arg4: memref<128x64xbf16, #tpu.memory_space<vmem>>, %arg5: memref<1x64xf32, #tpu.memory_space<vmem>>, %arg6: memref<64x128xbf16, #tpu.memory_space<vmem>>, %arg7: memref<1x128xf32, #tpu.memory_space<vmem>>, %arg8: memref<128x128xf32, #tpu.memory_space<vmem>>) attributes {dimension_semantics = [#tpu.dimension_semantics<parallel>], iteration_bounds = array<i64: 2>, scalar_prefetch = 0 : i64, scratch_operands = 0 : i64, tpu.core_type = #tpu.core_type<tc>, window_params = [{transform_indices = @transform_0, window_bounds = array<i64: 128, 784>}, {pipeline_mode = #tpu.pipeline_mode<synchronous>, transform_indices = @transform_1, window_bounds = array<i64: 784, 128>}, {pipeline_mode = #tpu.pipeline_mode<synchronous>, transform_indices = @transform_2, window_bounds = array<i64: 1, 128>}, {pipeline_mode = #tpu.pipeline_mode<synchronous>, transform_indices = @transform_3, window_bounds = array<i64: 128, 64>}, {pipeline_mode = #tpu.pipeline_mode<synchronous>, transform_indices = @transform_4, window_bounds = array<i64: 1, 64>}, {pipeline_mode = #tpu.pipeline_mode<synchronous>, transform_indices = @transform_5, window_bounds = array<i64: 64, 128>}, {pipeline_mode = #tpu.pipeline_mode<synchronous>, transform_indices = @transform_6, window_bounds = array<i64: 1, 128>}, {transform_indices = @transform_7, window_bounds = array<i64: 128, 128>}]} {
    %c0 = arith.constant 0 : index
    %c0_0 = arith.constant 0 : index
    %0 = vector.load %arg1[%c0, %c0_0] : memref<128x784xbf16, #tpu.memory_space<vmem>>, vector<128x784xbf16>
    %c0_1 = arith.constant 0 : index
    %c0_2 = arith.constant 0 : index
    %1 = vector.load %arg2[%c0_1, %c0_2] : memref<784x128xbf16, #tpu.memory_space<vmem>>, vector<784x128xbf16>
    %cst = arith.constant dense<0.000000e+00> : vector<128x128xf32>
    %2 = tpu.matmul %0, %1, %cst {dimension_numbers = #tpu.dot_dimension_numbers<[1], [0], [0], [1], [0, 0, 1, 1], [], []>} : vector<128x784xbf16>, vector<784x128xbf16>, vector<128x128xf32> -> vector<128x128xf32>
    %c0_3 = arith.constant 0 : index
    %c0_4 = arith.constant 0 : index
    %3 = vector.load %arg3[%c0_3, %c0_4] : memref<1x128xf32, #tpu.memory_space<vmem>>, vector<1x128xf32>
    %4 = vector.broadcast %3 : vector<1x128xf32> to vector<128x128xf32>
    %5 = arith.addf %2, %4 : vector<128x128xf32>
    %cst_5 = arith.constant 0.000000e+00 : f32
    %6 = vector.broadcast %cst_5 : f32 to vector<128x128xf32>
    %7 = arith.maximumf %5, %6 : vector<128x128xf32>
    %8 = arith.truncf %7 : vector<128x128xf32> to vector<128x128xbf16>
    %c0_6 = arith.constant 0 : index
    %c0_7 = arith.constant 0 : index
    %9 = vector.load %arg4[%c0_6, %c0_7] : memref<128x64xbf16, #tpu.memory_space<vmem>>, vector<128x64xbf16>
    %cst_8 = arith.constant dense<0.000000e+00> : vector<128x64xf32>
    %10 = tpu.matmul %8, %9, %cst_8 {dimension_numbers = #tpu.dot_dimension_numbers<[1], [0], [0], [1], [0, 0, 1, 1], [], []>} : vector<128x128xbf16>, vector<128x64xbf16>, vector<128x64xf32> -> vector<128x64xf32>
    %c0_9 = arith.constant 0 : index
    %c0_10 = arith.constant 0 : index
    %11 = vector.load %arg5[%c0_9, %c0_10] : memref<1x64xf32, #tpu.memory_space<vmem>>, vector<1x64xf32>
    %12 = vector.broadcast %11 : vector<1x64xf32> to vector<128x64xf32>
    %13 = arith.addf %10, %12 : vector<128x64xf32>
    %cst_11 = arith.constant 0.000000e+00 : f32
    %14 = vector.broadcast %cst_11 : f32 to vector<128x64xf32>
    %15 = arith.maximumf %13, %14 : vector<128x64xf32>
    %16 = arith.truncf %15 : vector<128x64xf32> to vector<128x64xbf16>
    %c0_12 = arith.constant 0 : index
    %c0_13 = arith.constant 0 : index
    %17 = vector.load %arg6[%c0_12, %c0_13] : memref<64x128xbf16, #tpu.memory_space<vmem>>, vector<64x128xbf16>
    %cst_14 = arith.constant dense<0.000000e+00> : vector<128x128xf32>
    %18 = tpu.matmul %16, %17, %cst_14 {dimension_numbers = #tpu.dot_dimension_numbers<[1], [0], [0], [1], [0, 0, 1, 1], [], []>} : vector<128x64xbf16>, vector<64x128xbf16>, vector<128x128xf32> -> vector<128x128xf32>
    %c0_15 = arith.constant 0 : index
    %c0_16 = arith.constant 0 : index
    %19 = vector.load %arg7[%c0_15, %c0_16] : memref<1x128xf32, #tpu.memory_space<vmem>>, vector<1x128xf32>
    %20 = vector.broadcast %19 : vector<1x128xf32> to vector<128x128xf32>
    %21 = arith.addf %18, %20 : vector<128x128xf32>
    %cst_17 = arith.constant dense<0xFF800000> : vector<128xf32>
    %22 = vector.multi_reduction <maximumf>, %21, %cst_17 [1] : vector<128x128xf32> to vector<128xf32>
    %23 = vector.shape_cast %22 : vector<128xf32> to vector<128x1xf32>
    %24 = vector.broadcast %23 : vector<128x1xf32> to vector<128x128xf32>
    %25 = arith.subf %21, %24 : vector<128x128xf32>
    %26 = math.exp %25 : vector<128x128xf32>
    %cst_18 = arith.constant dense<0.000000e+00> : vector<128xf32>
    %27 = vector.multi_reduction <add>, %26, %cst_18 [1] : vector<128x128xf32> to vector<128xf32>
    %28 = vector.shape_cast %27 : vector<128xf32> to vector<128x1xf32>
    %29 = tpu.reciprocal %28 {approx = true} : vector<128x1xf32> -> vector<128x1xf32>
    %30 = vector.broadcast %29 : vector<128x1xf32> to vector<128x128xf32>
    %31 = arith.mulf %26, %30 : vector<128x128xf32>
    %c0_19 = arith.constant 0 : index
    %c0_20 = arith.constant 0 : index
    %32 = vector.load %arg8[%c0_19, %c0_20] : memref<128x128xf32, #tpu.memory_space<vmem>>, vector<128x128xf32>
    tpu.vector_store %arg8[%c0_19, %c0_20], %31 {strides = array<i32>} : memref<128x128xf32, #tpu.memory_space<vmem>>, vector<128x128xf32>,
    return
  }
  func.func @transform_0(%arg0: i32) -> (i32, i32) {
    %c0_i32 = arith.constant 0 : i32
    %c0_i32_0 = arith.constant 0 : i32
    return %arg0, %c0_i32 : i32, i32
  }
  func.func @transform_1(%arg0: i32) -> (i32, i32) {
    %c0_i32 = arith.constant 0 : i32
    %c0_i32_0 = arith.constant 0 : i32
    %c0_i32_1 = arith.constant 0 : i32
    return %c0_i32, %c0_i32_0 : i32, i32
  }
  func.func @transform_2(%arg0: i32) -> (i32, i32) {
    %c0_i32 = arith.constant 0 : i32
    %c0_i32_0 = arith.constant 0 : i32
    %c0_i32_1 = arith.constant 0 : i32
    return %c0_i32, %c0_i32_0 : i32, i32
  }
  func.func @transform_3(%arg0: i32) -> (i32, i32) {
    %c0_i32 = arith.constant 0 : i32
    %c0_i32_0 = arith.constant 0 : i32
    %c0_i32_1 = arith.constant 0 : i32
    return %c0_i32, %c0_i32_0 : i32, i32
  }
  func.func @transform_4(%arg0: i32) -> (i32, i32) {
    %c0_i32 = arith.constant 0 : i32
    %c0_i32_0 = arith.constant 0 : i32
    %c0_i32_1 = arith.constant 0 : i32
    return %c0_i32, %c0_i32_0 : i32, i32
  }
  func.func @transform_5(%arg0: i32) -> (i32, i32) {
    %c0_i32 = arith.constant 0 : i32
    %c0_i32_0 = arith.constant 0 : i32
    %c0_i32_1 = arith.constant 0 : i32
    return %c0_i32, %c0_i32_0 : i32, i32
  }
  func.func @transform_6(%arg0: i32) -> (i32, i32) {
    %c0_i32 = arith.constant 0 : i32
    %c0_i32_0 = arith.constant 0 : i32
    %c0_i32_1 = arith.constant 0 : i32
    return %c0_i32, %c0_i32_0 : i32, i32
  }
  func.func @transform_7(%arg0: i32) -> (i32, i32) {
    %c0_i32 = arith.constant 0 : i32
    %c0_i32_0 = arith.constant 0 : i32
    return %arg0, %c0_i32 : i32, i32
  }
}

</mosaic_0001>

<llo_original>
// kernel: tpu_custom_call.1
$region0: #{tpu_custom_call.1}
  #allocation0 [shape = 'u32[]', space=smem, size = 0x4, offset = 0x4, fixed_abs, tag = 'smem constant byte address 0x4 - core index']
  #allocation1 [shape = 'u32[72,128]{1,0:T(1,128)}', space=vmem, size = 0x9000, scoped, tag = 'internal scratch']
  %s0 = inlined_call_operand.vmem [shape: bf16[256,784], index: 0, kind: input, shape index: {}]
  %s1 = inlined_call_operand.vmem [shape: bf16[784,128], index: 1, kind: input, shape index: {}]
  %s2 = inlined_call_operand.vmem [shape: f32[1,128], index: 2, kind: input, shape index: {}]
  %s3 = inlined_call_operand.vmem [shape: bf16[128,64], index: 3, kind: input, shape index: {}]
  %s4 = inlined_call_operand.vmem [shape: f32[1,64], index: 4, kind: input, shape index: {}]
  %s5 = inlined_call_operand.vmem [shape: bf16[64,128], index: 5, kind: input, shape index: {}]
  %s6 = inlined_call_operand.vmem [shape: f32[1,128], index: 6, kind: input, shape index: {}]
  %s7 = inlined_call_operand.hbm [shape: f32[256,128], index: 7, kind: output, shape index: {}]
  %s8 = sld [smem:[#allocation0]]
  $region61: #{tpu_custom_call.1} parent=0
    _
  %s10 = ssub.s32 1, %s8
  %s11 = scalar_select 0, %s10, %s8
  $region1: #{tpu_custom_call.1} parent=0
    #allocation2 [shape = 'u8[131072]{0}', space=vmem, size = 0x20000, scoped, tag = 'output window, operand 0']
    #allocation3 [shape = 's32[2]{0}', space=sflag, size = 0x8, scoped, tag = 'scoped memory for tpu_custom_call.1']
    %12 = vsyncpa [#allocation3], 0
    %s13 = scalar_lea.sflag [#allocation3], 1
    %14 = vsyncpa %s13, 0
    loop: start=0, step=1, limit=4
    $region2: #{tpu_custom_call.1} parent=1 // loop_pre_header
      _
    $region3: #{tpu_custom_call.1} parent=1 // loop_header
      %s16 = sphi 0, %s20
      %p17 = scmp.ge.s32.totalorder %s16, 4
      %s26 = sphi 0, %s28
      %s29 = sphi 0, %s26
      %s30 = sphi 0, %s29
      %s46 = sphi 0, %s30
      %s50 = sphi 0, %s50
      %s52 = sphi 0, %s50
      %s53 = sphi 0, %s52
      %s67 = sphi 0, %s53
      %s71 = sphi 0, %s71
      %s73 = sphi 0, %s71
      %s74 = sphi 0, %s73
      %s88 = sphi 0, %s74
      %s92 = sphi 0, %s92
      %s94 = sphi 0, %s92
      %s95 = sphi 0, %s94
      %s109 = sphi 0, %s95
      %s113 = sphi 0, %s113
      %s115 = sphi 0, %s113
      %s116 = sphi 0, %s115
      %s130 = sphi 0, %s116
      %s134 = sphi 0, %s134
      %s136 = sphi 0, %s134
      %s137 = sphi 0, %s136
      %s151 = sphi 0, %s137
      %s155 = sphi 0, %s155
      %s157 = sphi 0, %s155
      %s158 = sphi 0, %s157
      %s172 = sphi 0, %s158
      %s178 = sphi 0, %s180
      %s181 = sphi 0, %s178
      %s182 = sphi 0, %s181
      %s198 = sphi 0, %s182
    $region4: #{tpu_custom_call.1} parent=1 // loop_header_branch
      %19 = sbr.rel (%p17) target = $region8
    $region5: #{tpu_custom_call.1} parent=1 // loop_body
      %s21 = ssub.s32 %s16, 1
      %s22 = ssub.s32 %s16, 2
      %s23 = sadd.s32 %s16, 1
      %s24 = ssub.s32 %s16, %s23
      %p25 = scmp.eq.s32.totalorder %s24, 0
      %s27 = sadd.s32 %s26, 1
      %s28 = scalar_select %p25, %s26, %s27
      %p31 = pneg %p25
      %p32 = scmp.eq.s32.totalorder %s16, 1
      %p33 = por %p31, %p32
      %p34 = scmp.ne.s32.totalorder %s26, %s29
      %p35 = scmp.eq.s32.totalorder %s16, 0
      %p36 = por %p34, %p35
      %p37 = scmp.ne.s32.totalorder %s26, %s29
      %p38 = scmp.eq.s32.totalorder %s21, 1
      %p39 = por %p37, %p38
      %p40 = scmp.ne.s32.totalorder %s29, %s30
      %p41 = scmp.eq.s32.totalorder %s21, 0
      %p42 = por %p40, %p41
      %p43 = scmp.ne.s32.totalorder %s29, %s30
      %p44 = scmp.eq.s32.totalorder %s22, 1
      %p45 = por %p43, %p44
      %p47 = scmp.ne.s32.totalorder %s30, %s46
      %p48 = scmp.eq.s32.totalorder %s22, 0
      %p49 = por %p47, %p48
      %s51 = sadd.s32 %s50, 1
      %p54 = scmp.eq.s32.totalorder %s16, 1
      %p55 = scmp.ne.s32.totalorder %s50, %s52
      %p56 = scmp.eq.s32.totalorder %s16, 0
      %p57 = por %p55, %p56
      %p58 = scmp.ne.s32.totalorder %s50, %s52
      %p59 = scmp.eq.s32.totalorder %s21, 1
      %p60 = por %p58, %p59
      %p61 = scmp.ne.s32.totalorder %s52, %s53
      %p62 = scmp.eq.s32.totalorder %s21, 0
      %p63 = por %p61, %p62
      %p64 = scmp.ne.s32.totalorder %s52, %s53
      %p65 = scmp.eq.s32.totalorder %s22, 1
      %p66 = por %p64, %p65
      %p68 = scmp.ne.s32.totalorder %s53, %s67
      %p69 = scmp.eq.s32.totalorder %s22, 0
      %p70 = por %p68, %p69
      %s72 = sadd.s32 %s71, 1
      %p75 = scmp.eq.s32.totalorder %s16, 1
      %p76 = scmp.ne.s32.totalorder %s71, %s73
      %p77 = scmp.eq.s32.totalorder %s16, 0
      %p78 = por %p76, %p77
      %p79 = scmp.ne.s32.totalorder %s71, %s73
      %p80 = scmp.eq.s32.totalorder %s21, 1
      %p81 = por %p79, %p80
      %p82 = scmp.ne.s32.totalorder %s73, %s74
      %p83 = scmp.eq.s32.totalorder %s21, 0
      %p84 = por %p82, %p83
      %p85 = scmp.ne.s32.totalorder %s73, %s74
      %p86 = scmp.eq.s32.totalorder %s22, 1
      %p87 = por %p85, %p86
      %p89 = scmp.ne.s32.totalorder %s74, %s88
      %p90 = scmp.eq.s32.totalorder %s22, 0
      %p91 = por %p89, %p90
      %s93 = sadd.s32 %s92, 1
      %p96 = scmp.eq.s32.totalorder %s16, 1
      %p97 = scmp.ne.s32.totalorder %s92, %s94
      %p98 = scmp.eq.s32.totalorder %s16, 0
      %p99 = por %p97, %p98
      %p100 = scmp.ne.s32.totalorder %s92, %s94
      %p101 = scmp.eq.s32.totalorder %s21, 1
      %p102 = por %p100, %p101
      %p103 = scmp.ne.s32.totalorder %s94, %s95
      %p104 = scmp.eq.s32.totalorder %s21, 0
      %p105 = por %p103, %p104
      %p106 = scmp.ne.s32.totalorder %s94, %s95
      %p107 = scmp.eq.s32.totalorder %s22, 1
      %p108 = por %p106, %p107
      %p110 = scmp.ne.s32.totalorder %s95, %s109
      %p111 = scmp.eq.s32.totalorder %s22, 0
      %p112 = por %p110, %p111
      %s114 = sadd.s32 %s113, 1
      %p117 = scmp.eq.s32.totalorder %s16, 1
      %p118 = scmp.ne.s32.totalorder %s113, %s115
      %p119 = scmp.eq.s32.totalorder %s16, 0
      %p120 = por %p118, %p119
      %p121 = scmp.ne.s32.totalorder %s113, %s115
      %p122 = scmp.eq.s32.totalorder %s21, 1
      %p123 = por %p121, %p122
      %p124 = scmp.ne.s32.totalorder %s115, %s116
      %p125 = scmp.eq.s32.totalorder %s21, 0
      %p126 = por %p124, %p125
      %p127 = scmp.ne.s32.totalorder %s115, %s116
      %p128 = scmp.eq.s32.totalorder %s22, 1
      %p129 = por %p127, %p128
      %p131 = scmp.ne.s32.totalorder %s116, %s130
      %p132 = scmp.eq.s32.totalorder %s22, 0
      %p133 = por %p131, %p132
      %s135 = sadd.s32 %s134, 1
      %p138 = scmp.eq.s32.totalorder %s16, 1
      %p139 = scmp.ne.s32.totalorder %s134, %s136
      %p140 = scmp.eq.s32.totalorder %s16, 0
      %p141 = por %p139, %p140
      %p142 = scmp.ne.s32.totalorder %s134, %s136
      %p143 = scmp.eq.s32.totalorder %s21, 1
      %p144 = por %p142, %p143
      %p145 = scmp.ne.s32.totalorder %s136, %s137
      %p146 = scmp.eq.s32.totalorder %s21, 0
      %p147 = por %p145, %p146
      %p148 = scmp.ne.s32.totalorder %s136, %s137
      %p149 = scmp.eq.s32.totalorder %s22, 1
      %p150 = por %p148, %p149
      %p152 = scmp.ne.s32.totalorder %s137, %s151
      %p153 = scmp.eq.s32.totalorder %s22, 0
      %p154 = por %p152, %p153
      %s156 = sadd.s32 %s155, 1
      %p159 = scmp.eq.s32.totalorder %s16, 1
      %p160 = scmp.ne.s32.totalorder %s155, %s157
      %p161 = scmp.eq.s32.totalorder %s16, 0
      %p162 = por %p160, %p161
      %p163 = scmp.ne.s32.totalorder %s155, %s157
      %p164 = scmp.eq.s32.totalorder %s21, 1
      %p165 = por %p163, %p164
      %p166 = scmp.ne.s32.totalorder %s157, %s158
      %p167 = scmp.eq.s32.totalorder %s21, 0
      %p168 = por %p166, %p167
      %p169 = scmp.ne.s32.totalorder %s157, %s158
      %p170 = scmp.eq.s32.totalorder %s22, 1
      %p171 = por %p169, %p170
      %p173 = scmp.ne.s32.totalorder %s158, %s172
      %p174 = scmp.eq.s32.totalorder %s22, 0
      %p175 = por %p173, %p174
      %s176 = ssub.s32 %s16, %s23
      %p177 = scmp.eq.s32.totalorder %s176, 0
      %s179 = sadd.s32 %s178, 1
      %s180 = scalar_select %p177, %s178, %s179
      %p183 = pneg %p177
      %p184 = scmp.eq.s32.totalorder %s16, 1
      %p185 = por %p183, %p184
      %p186 = scmp.ne.s32.totalorder %s178, %s181
      %p187 = scmp.eq.s32.totalorder %s16, 0
      %p188 = por %p186, %p187
      %p189 = scmp.ne.s32.totalorder %s178, %s181
      %p190 = scmp.eq.s32.totalorder %s21, 1
      %p191 = por %p189, %p190
      %p192 = scmp.ne.s32.totalorder %s181, %s182
      %p193 = scmp.eq.s32.totalorder %s21, 0
      %p194 = por %p192, %p193
      %p195 = scmp.ne.s32.totalorder %s181, %s182
      %p196 = scmp.eq.s32.totalorder %s22, 1
      %p197 = por %p195, %p196
      %p199 = scmp.ne.s32.totalorder %s182, %s198
      %p200 = scmp.eq.s32.totalorder %s22, 0
      %p201 = por %p199, %p200
      %p202 = scmp.le.s32.totalorder 1, %s16
      %p203 = scmp.lt.s32.totalorder %s16, 3
      %p204 = pnand %p202, %p203
      %p205 = pneg %p204
      // Predicated region
      $region9: #{tpu_custom_call.1} parent=5 // pred_check
        _
      $region10: #{tpu_custom_call.1} parent=5 // pred_check_branch
        %207 = sbr.rel (%p204) target = $region12
      $region11: #{tpu_custom_call.1} parent=5 // pred_region
        %s208 = ssub.s32 %s16, 1
        // Predicated region
        $region13: #{tpu_custom_call.1} parent=11 // pred_check
          %p209 = pneg %p63
        $region14: #{tpu_custom_call.1} parent=11 // pred_check_branch
          %211 = sbr.rel (%p209) target = $region16
        $region15: #{tpu_custom_call.1} parent=11 // pred_region
          _
        $region16: #{tpu_custom_call.1} parent=11 // pred_fallthru
          _
        // Predicated region
        $region17: #{tpu_custom_call.1} parent=11 // pred_check
          %p212 = pneg %p84
        $region18: #{tpu_custom_call.1} parent=11 // pred_check_branch
          %214 = sbr.rel (%p212) target = $region20
        $region19: #{tpu_custom_call.1} parent=11 // pred_region
          _
        $region20: #{tpu_custom_call.1} parent=11 // pred_fallthru
          _
        // Predicated region
        $region21: #{tpu_custom_call.1} parent=11 // pred_check
          %p215 = pneg %p105
        $region22: #{tpu_custom_call.1} parent=11 // pred_check_branch
          %217 = sbr.rel (%p215) target = $region24
        $region23: #{tpu_custom_call.1} parent=11 // pred_region
          _
        $region24: #{tpu_custom_call.1} parent=11 // pred_fallthru
          _
        // Predicated region
        $region25: #{tpu_custom_call.1} parent=11 // pred_check
          %p218 = pneg %p126
        $region26: #{tpu_custom_call.1} parent=11 // pred_check_branch
          %220 = sbr.rel (%p218) target = $region28
        $region27: #{tpu_custom_call.1} parent=11 // pred_region
          _
        $region28: #{tpu_custom_call.1} parent=11 // pred_fallthru
          _
        // Predicated region
        $region29: #{tpu_custom_call.1} parent=11 // pred_check
          %p221 = pneg %p147
        $region30: #{tpu_custom_call.1} parent=11 // pred_check_branch
          %223 = sbr.rel (%p221) target = $region32
        $region31: #{tpu_custom_call.1} parent=11 // pred_region
          _
        $region32: #{tpu_custom_call.1} parent=11 // pred_fallthru
          _
        // Predicated region
        $region33: #{tpu_custom_call.1} parent=11 // pred_check
          %p224 = pneg %p168
        $region34: #{tpu_custom_call.1} parent=11 // pred_check_branch
          %226 = sbr.rel (%p224) target = $region36
        $region35: #{tpu_custom_call.1} parent=11 // pred_region
          _
        $region36: #{tpu_custom_call.1} parent=11 // pred_fallthru
          _
      $region12: #{tpu_custom_call.1} parent=5 // pred_fallthru
        _
      %p227 = scmp.lt.s32.totalorder %s16, 2
      // Predicated region
      $region37: #{tpu_custom_call.1} parent=5 // pred_check
        %p228 = pneg %p227
      $region38: #{tpu_custom_call.1} parent=5 // pred_check_branch
        %230 = sbr.rel (%p228) target = $region40
      $region39: #{tpu_custom_call.1} parent=5 // pred_region
        // Predicated region
        $region41: #{tpu_custom_call.1} parent=39 // pred_check
          %p231 = pneg %p36
        $region42: #{tpu_custom_call.1} parent=39 // pred_check_branch
          %233 = sbr.rel (%p231) target = $region44
        $region43: #{tpu_custom_call.1} parent=39 // pred_region
          %s234 = smul.u32 16, %s16
          %p235 = scmp.lt.s32.totalorder %s234, 31
          %s236 = scalar_select %p235, %s234, 31
          %s237 = smul.addr %s236, 7
          %s238 = smul.addr %s237, 4
          %s239 = scalar_lea.vmem %s0, %s238
          %s240 = smul.u32 16, %s16
        $region44: #{tpu_custom_call.1} parent=39 // pred_fallthru
          _
      $region40: #{tpu_custom_call.1} parent=5 // pred_fallthru
        _
      %p241 = scmp.le.s32.totalorder 1, %s16
      %p242 = scmp.lt.s32.totalorder %s16, 3
      %p243 = pnand %p241, %p242
      %p244 = pneg %p243
      // Predicated region
      $region45: #{tpu_custom_call.1} parent=5 // pred_check
        _
      $region46: #{tpu_custom_call.1} parent=5 // pred_check_branch
        %246 = sbr.rel (%p243) target = $region48
      $region47: #{tpu_custom_call.1} parent=5 // pred_region
        %s247 = ssub.s32 %s16, 1
        %s248 = smul.u32 16, %s21
        %p249 = scmp.lt.s32.totalorder %s248, 31
        %s250 = scalar_select %p249, %s248, 31
        %s251 = smul.addr %s250, 7
        %s252 = smul.addr %s251, 4
        %s253 = scalar_lea.vmem %s0, %s252
        %p254 = pneg %p42
        %p255 = pneg %p39
        %p256 = pneg %p63
        %p257 = pneg %p60
        %p258 = pneg %p84
        %p259 = pneg %p81
        %p260 = pneg %p105
        %p261 = pneg %p102
        %p262 = pneg %p126
        %p263 = pneg %p123
        %p264 = pneg %p147
        %p265 = pneg %p144
        %p266 = pneg %p168
        %p267 = pneg %p165
        %p268 = pneg %p194
        %p269 = pneg %p191
        %s270 = sand.u32 %s181, 1
        %s271 = scalar_lea.sflag [#allocation3], %s270
        %s272 = sand.u32 %s181, 1
        %s273 = smul.addr %s272, 128
        %s274 = scalar_lea.vmem [#allocation2], %s273
        %s275 = smul.u32 16, %s21
        %p276 = scmp.lt.s32.totalorder %s275, 31
        %s277 = scalar_select %p276, %s275, 31
        %s278 = smul.addr %s277, 7
        %s279 = smul.addr %s278, 4
        %s280 = scalar_lea.vmem %s0, %s279
        %s281 = smul.u32 16, %s21
        %s282 = smul.u32 16, %s21
        %v284 = vld [vmem:[%s280] sm:$0xff]
        %v285 = vld [vmem:[%s280 + $0x8] sm:$0xff]
        %v286 = vld [vmem:[%s280 + $0x10] sm:$0xff]
        %v287 = vld [vmem:[%s280 + $0x18] sm:$0xf]
        %v288 = vld [vmem:[%s280 + $0x1c] sm:$0xff]
        %v289 = vld [vmem:[%s280 + $0x24] sm:$0xff]
        %v290 = vld [vmem:[%s280 + $0x2c] sm:$0xff]
        %v291 = vld [vmem:[%s280 + $0x34] sm:$0xf]
        %v292 = vld [vmem:[%s280 + $0x38] sm:$0xff]
        %v293 = vld [vmem:[%s280 + $0x40] sm:$0xff]
        %v294 = vld [vmem:[%s280 + $0x48] sm:$0xff]
        %v295 = vld [vmem:[%s280 + $0x50] sm:$0xf]
        %v296 = vld [vmem:[%s280 + $0x54] sm:$0xff]
        %v297 = vld [vmem:[%s280 + $0x5c] sm:$0xff]
        %v298 = vld [vmem:[%s280 + $0x64] sm:$0xff]
        %v299 = vld [vmem:[%s280 + $0x6c] sm:$0xf]
        %v300 = vld [vmem:[%s280 + $0x70] sm:$0xff]
        %v301 = vld [vmem:[%s280 + $0x78] sm:$0xff]
        %v302 = vld [vmem:[%s280 + $0x80] sm:$0xff]
        %v303 = vld [vmem:[%s280 + $0x88] sm:$0xf]
        %v304 = vld [vmem:[%s280 + $0x8c] sm:$0xff]
        %v305 = vld [vmem:[%s280 + $0x94] sm:$0xff]
        %v306 = vld [vmem:[%s280 + $0x9c] sm:$0xff]
        %v307 = vld [vmem:[%s280 + $0xa4] sm:$0xf]
        %v308 = vld [vmem:[%s280 + $0xa8] sm:$0xff]
        %v309 = vld [vmem:[%s280 + $0xb0] sm:$0xff]
        %v310 = vld [vmem:[%s280 + $0xb8] sm:$0xff]
        %v311 = vld [vmem:[%s280 + $0xc0] sm:$0xf]
        %v312 = vld [vmem:[%s280 + $0xc4] sm:$0xff]
        %v313 = vld [vmem:[%s280 + $0xcc] sm:$0xff]
        %v314 = vld [vmem:[%s280 + $0xd4] sm:$0xff]
        %v315 = vld [vmem:[%s280 + $0xdc] sm:$0xf]
        %v316 = vld [vmem:[%s280 + $0xe0] sm:$0xff]
        %v317 = vld [vmem:[%s280 + $0xe8] sm:$0xff]
        %v318 = vld [vmem:[%s280 + $0xf0] sm:$0xff]
        %v319 = vld [vmem:[%s280 + $0xf8] sm:$0xf]
        %v320 = vld [vmem:[%s280 + $0xfc] sm:$0xff]
        %v321 = vld [vmem:[%s280 + $0x104] sm:$0xff]
        %v322 = vld [vmem:[%s280 + $0x10c] sm:$0xff]
        %v323 = vld [vmem:[%s280 + $0x114] sm:$0xf]
        %v324 = vld [vmem:[%s280 + $0x118] sm:$0xff]
        %v325 = vld [vmem:[%s280 + $0x120] sm:$0xff]
        %v326 = vld [vmem:[%s280 + $0x128] sm:$0xff]
        %v327 = vld [vmem:[%s280 + $0x130] sm:$0xf]
        %v328 = vld [vmem:[%s280 + $0x134] sm:$0xff]
        %v329 = vld [vmem:[%s280 + $0x13c] sm:$0xff]
        %v330 = vld [vmem:[%s280 + $0x144] sm:$0xff]
        %v331 = vld [vmem:[%s280 + $0x14c] sm:$0xf]
        %v332 = vld [vmem:[%s280 + $0x150] sm:$0xff]
        %v333 = vld [vmem:[%s280 + $0x158] sm:$0xff]
        %v334 = vld [vmem:[%s280 + $0x160] sm:$0xff]
        %v335 = vld [vmem:[%s280 + $0x168] sm:$0xf]
        %v336 = vld [vmem:[%s280 + $0x16c] sm:$0xff]
        %v337 = vld [vmem:[%s280 + $0x174] sm:$0xff]
        %v338 = vld [vmem:[%s280 + $0x17c] sm:$0xff]
        %v339 = vld [vmem:[%s280 + $0x184] sm:$0xf]
        %v340 = vld [vmem:[%s280 + $0x188] sm:$0xff]
        %v341 = vld [vmem:[%s280 + $0x190] sm:$0xff]
        %v342 = vld [vmem:[%s280 + $0x198] sm:$0xff]
        %v343 = vld [vmem:[%s280 + $0x1a0] sm:$0xf]
        %v344 = vld [vmem:[%s280 + $0x1a4] sm:$0xff]
        %v345 = vld [vmem:[%s280 + $0x1ac] sm:$0xff]
        %v346 = vld [vmem:[%s280 + $0x1b4] sm:$0xff]
        %v347 = vld [vmem:[%s280 + $0x1bc] sm:$0xf]
        %v348 = vld [vmem:[%s1] sm:$0xf]
        %v349 = vld [vmem:[%s1 + $0x4] sm:$0xf]
        %v350 = vld [vmem:[%s1 + $0x8] sm:$0xf]
        %v351 = vld [vmem:[%s1 + $0xc] sm:$0xf]
        %v352 = vld [vmem:[%s1 + $0x10] sm:$0xf]
        %v353 = vld [vmem:[%s1 + $0x14] sm:$0xf]
        %v354 = vld [vmem:[%s1 + $0x18] sm:$0xf]
        %v355 = vld [vmem:[%s1 + $0x1c] sm:$0xf]
        %v356 = vld [vmem:[%s1 + $0x20] sm:$0xf]
        %v357 = vld [vmem:[%s1 + $0x24] sm:$0xf]
        %v358 = vld [vmem:[%s1 + $0x28] sm:$0xf]
        %v359 = vld [vmem:[%s1 + $0x2c] sm:$0xf]
        %v360 = vld [vmem:[%s1 + $0x30] sm:$0xf]
        %v361 = vld [vmem:[%s1 + $0x34] sm:$0xf]
        %v362 = vld [vmem:[%s1 + $0x38] sm:$0xf]
        %v363 = vld [vmem:[%s1 + $0x3c] sm:$0xf]
        %v364 = vld [vmem:[%s1 + $0x40] sm:$0xf]
        %v365 = vld [vmem:[%s1 + $0x44] sm:$0xf]
        %v366 = vld [vmem:[%s1 + $0x48] sm:$0xf]
        %v367 = vld [vmem:[%s1 + $0x4c] sm:$0xf]
        %v368 = vld [vmem:[%s1 + $0x50] sm:$0xf]
        %v369 = vld [vmem:[%s1 + $0x54] sm:$0xf]
        %v370 = vld [vmem:[%s1 + $0x58] sm:$0xf]
        %v371 = vld [vmem:[%s1 + $0x5c] sm:$0xf]
        %v372 = vld [vmem:[%s1 + $0x60] sm:$0xf]
        %v373 = vld [vmem:[%s1 + $0x64] sm:$0xf]
        %v374 = vld [vmem:[%s1 + $0x68] sm:$0xf]
        %v375 = vld [vmem:[%s1 + $0x6c] sm:$0xf]
        %v376 = vld [vmem:[%s1 + $0x70] sm:$0xf]
        %v377 = vld [vmem:[%s1 + $0x74] sm:$0xf]
        %v378 = vld [vmem:[%s1 + $0x78] sm:$0xf]
        %v379 = vld [vmem:[%s1 + $0x7c] sm:$0xf]
        %v380 = vld [vmem:[%s1 + $0x80] sm:$0xf]
        %v381 = vld [vmem:[%s1 + $0x84] sm:$0xf]
        %v382 = vld [vmem:[%s1 + $0x88] sm:$0xf]
        %v383 = vld [vmem:[%s1 + $0x8c] sm:$0xf]
        %v384 = vld [vmem:[%s1 + $0x90] sm:$0xf]
        %v385 = vld [vmem:[%s1 + $0x94] sm:$0xf]
        %v386 = vld [vmem:[%s1 + $0x98] sm:$0xf]
        %v387 = vld [vmem:[%s1 + $0x9c] sm:$0xf]
        %v388 = vld [vmem:[%s1 + $0xa0] sm:$0xf]
        %v389 = vld [vmem:[%s1 + $0xa4] sm:$0xf]
        %v390 = vld [vmem:[%s1 + $0xa8] sm:$0xf]
        %v391 = vld [vmem:[%s1 + $0xac] sm:$0xf]
        %v392 = vld [vmem:[%s1 + $0xb0] sm:$0xf]
        %v393 = vld [vmem:[%s1 + $0xb4] sm:$0xf]
        %v394 = vld [vmem:[%s1 + $0xb8] sm:$0xf]
        %v395 = vld [vmem:[%s1 + $0xbc] sm:$0xf]
        %v396 = vld [vmem:[%s1 + $0xc0] sm:$0xf]
        %v397 = vld [vmem:[%s1 + $0xc4] sm:$0xf]
        %v398 = vld [vmem:[%s1 + $0xc8] sm:$0xf]
        %v399 = vld [vmem:[%s1 + $0xcc] sm:$0xf]
        %v400 = vld [vmem:[%s1 + $0xd0] sm:$0xf]
        %v401 = vld [vmem:[%s1 + $0xd4] sm:$0xf]
        %v402 = vld [vmem:[%s1 + $0xd8] sm:$0xf]
        %v403 = vld [vmem:[%s1 + $0xdc] sm:$0xf]
        %v404 = vld [vmem:[%s1 + $0xe0] sm:$0xf]
        %v405 = vld [vmem:[%s1 + $0xe4] sm:$0xf]
        %v406 = vld [vmem:[%s1 + $0xe8] sm:$0xf]
        %v407 = vld [vmem:[%s1 + $0xec] sm:$0xf]
        %v408 = vld [vmem:[%s1 + $0xf0] sm:$0xf]
        %v409 = vld [vmem:[%s1 + $0xf4] sm:$0xf]
        %v410 = vld [vmem:[%s1 + $0xf8] sm:$0xf]
        %v411 = vld [vmem:[%s1 + $0xfc] sm:$0xf]
        %v412 = vld [vmem:[%s1 + $0x100] sm:$0xf]
        %v413 = vld [vmem:[%s1 + $0x104] sm:$0xf]
        %v414 = vld [vmem:[%s1 + $0x108] sm:$0xf]
        %v415 = vld [vmem:[%s1 + $0x10c] sm:$0xf]
        %v416 = vld [vmem:[%s1 + $0x110] sm:$0xf]
        %v417 = vld [vmem:[%s1 + $0x114] sm:$0xf]
        %v418 = vld [vmem:[%s1 + $0x118] sm:$0xf]
        %v419 = vld [vmem:[%s1 + $0x11c] sm:$0xf]
        %v420 = vld [vmem:[%s1 + $0x120] sm:$0xf]
        %v421 = vld [vmem:[%s1 + $0x124] sm:$0xf]
        %v422 = vld [vmem:[%s1 + $0x128] sm:$0xf]
        %v423 = vld [vmem:[%s1 + $0x12c] sm:$0xf]
        %v424 = vld [vmem:[%s1 + $0x130] sm:$0xf]
        %v425 = vld [vmem:[%s1 + $0x134] sm:$0xf]
        %v426 = vld [vmem:[%s1 + $0x138] sm:$0xf]
        %v427 = vld [vmem:[%s1 + $0x13c] sm:$0xf]
        %v428 = vld [vmem:[%s1 + $0x140] sm:$0xf]
        %v429 = vld [vmem:[%s1 + $0x144] sm:$0xf]
        %v430 = vld [vmem:[%s1 + $0x148] sm:$0xf]
        %v431 = vld [vmem:[%s1 + $0x14c] sm:$0xf]
        %v432 = vld [vmem:[%s1 + $0x150] sm:$0xf]
        %v433 = vld [vmem:[%s1 + $0x154] sm:$0xf]
        %v434 = vld [vmem:[%s1 + $0x158] sm:$0xf]
        %v435 = vld [vmem:[%s1 + $0x15c] sm:$0xf]
        %v436 = vld [vmem:[%s1 + $0x160] sm:$0xf]
        %v437 = vld [vmem:[%s1 + $0x164] sm:$0xf]
        %v438 = vld [vmem:[%s1 + $0x168] sm:$0xf]
        %v439 = vld [vmem:[%s1 + $0x16c] sm:$0xf]
        %v440 = vld [vmem:[%s1 + $0x170] sm:$0xf]
        %v441 = vld [vmem:[%s1 + $0x174] sm:$0xf]
        %v442 = vld [vmem:[%s1 + $0x178] sm:$0xf]
        %v443 = vld [vmem:[%s1 + $0x17c] sm:$0xf]
        %v444 = vld [vmem:[%s1 + $0x180] sm:$0xf]
        %v445 = vld [vmem:[%s1 + $0x184] sm:$0xf]
        %v446 = vld [vmem:[%s2] sm:$0x1]
        %v448 = vperm.slane %v446, 0
        %v514 = vunpack.c.l.b16 %v284
        %v515 = vunpack.c.h.b16 %v284
        %v516 = vunpack.c.l.b16 %v285
        %v517 = vunpack.c.h.b16 %v285
        %v518 = vunpack.c.l.b16 %v286
        %v519 = vunpack.c.h.b16 %v286
        %v520 = vunpack.c.l.b16 %v287
        %v521 = vunpack.c.l.b16 %v288
        %v522 = vunpack.c.h.b16 %v288
        %v523 = vunpack.c.l.b16 %v289
        %v524 = vunpack.c.h.b16 %v289
        %v525 = vunpack.c.l.b16 %v290
        %v526 = vunpack.c.h.b16 %v290
        %v527 = vunpack.c.l.b16 %v291
        %v528 = vunpack.c.l.b16 %v292
        %v529 = vunpack.c.h.b16 %v292
        %v530 = vunpack.c.l.b16 %v293
        %v531 = vunpack.c.h.b16 %v293
        %v532 = vunpack.c.l.b16 %v294
        %v533 = vunpack.c.h.b16 %v294
        %v534 = vunpack.c.l.b16 %v295
        %v535 = vunpack.c.l.b16 %v296
        %v536 = vunpack.c.h.b16 %v296
        %v537 = vunpack.c.l.b16 %v297
        %v538 = vunpack.c.h.b16 %v297
        %v539 = vunpack.c.l.b16 %v298
        %v540 = vunpack.c.h.b16 %v298
        %v541 = vunpack.c.l.b16 %v299
        %v542 = vunpack.c.l.b16 %v300
        %v543 = vunpack.c.h.b16 %v300
        %v544 = vunpack.c.l.b16 %v301
        %v545 = vunpack.c.h.b16 %v301
        %v546 = vunpack.c.l.b16 %v302
        %v547 = vunpack.c.h.b16 %v302
        %v548 = vunpack.c.l.b16 %v303
        %v549 = vunpack.c.l.b16 %v304
        %v550 = vunpack.c.h.b16 %v304
        %v551 = vunpack.c.l.b16 %v305
        %v552 = vunpack.c.h.b16 %v305
        %v553 = vunpack.c.l.b16 %v306
        %v554 = vunpack.c.h.b16 %v306
        %v555 = vunpack.c.l.b16 %v307
        %v556 = vunpack.c.l.b16 %v308
        %v557 = vunpack.c.h.b16 %v308
        %v558 = vunpack.c.l.b16 %v309
        %v559 = vunpack.c.h.b16 %v309
        %v560 = vunpack.c.l.b16 %v310
        %v561 = vunpack.c.h.b16 %v310
        %v562 = vunpack.c.l.b16 %v311
        %v563 = vunpack.c.l.b16 %v312
        %v564 = vunpack.c.h.b16 %v312
        %v565 = vunpack.c.l.b16 %v313
        %v566 = vunpack.c.h.b16 %v313
        %v567 = vunpack.c.l.b16 %v314
        %v568 = vunpack.c.h.b16 %v314
        %v569 = vunpack.c.l.b16 %v315
        %v570 = vunpack.c.l.b16 %v316
        %v571 = vunpack.c.h.b16 %v316
        %v572 = vunpack.c.l.b16 %v317
        %v573 = vunpack.c.h.b16 %v317
        %v574 = vunpack.c.l.b16 %v318
        %v575 = vunpack.c.h.b16 %v318
        %v576 = vunpack.c.l.b16 %v319
        %v577 = vunpack.c.l.b16 %v320
        %v578 = vunpack.c.h.b16 %v320
        %v579 = vunpack.c.l.b16 %v321
        %v580 = vunpack.c.h.b16 %v321
        %v581 = vunpack.c.l.b16 %v322
        %v582 = vunpack.c.h.b16 %v322
        %v583 = vunpack.c.l.b16 %v323
        %v584 = vunpack.c.l.b16 %v324
        %v585 = vunpack.c.h.b16 %v324
        %v586 = vunpack.c.l.b16 %v325
        %v587 = vunpack.c.h.b16 %v325
        %v588 = vunpack.c.l.b16 %v326
        %v589 = vunpack.c.h.b16 %v326
        %v590 = vunpack.c.l.b16 %v327
        %v591 = vunpack.c.l.b16 %v328
        %v592 = vunpack.c.h.b16 %v328
        %v593 = vunpack.c.l.b16 %v329
        %v594 = vunpack.c.h.b16 %v329
        %v595 = vunpack.c.l.b16 %v330
        %v596 = vunpack.c.h.b16 %v330
        %v597 = vunpack.c.l.b16 %v331
        %v598 = vunpack.c.l.b16 %v332
        %v599 = vunpack.c.h.b16 %v332
        %v600 = vunpack.c.l.b16 %v333
        %v601 = vunpack.c.h.b16 %v333
        %v602 = vunpack.c.l.b16 %v334
        %v603 = vunpack.c.h.b16 %v334
        %v604 = vunpack.c.l.b16 %v335
        %v605 = vunpack.c.l.b16 %v336
        %v606 = vunpack.c.h.b16 %v336
        %v607 = vunpack.c.l.b16 %v337
        %v608 = vunpack.c.h.b16 %v337
        %v609 = vunpack.c.l.b16 %v338
        %v610 = vunpack.c.h.b16 %v338
        %v611 = vunpack.c.l.b16 %v339
        %v612 = vunpack.c.l.b16 %v340
        %v613 = vunpack.c.h.b16 %v340
        %v614 = vunpack.c.l.b16 %v341
        %v615 = vunpack.c.h.b16 %v341
        %v616 = vunpack.c.l.b16 %v342
        %v617 = vunpack.c.h.b16 %v342
        %v618 = vunpack.c.l.b16 %v343
        %v619 = vunpack.c.l.b16 %v344
        %v620 = vunpack.c.h.b16 %v344
        %v621 = vunpack.c.l.b16 %v345
        %v622 = vunpack.c.h.b16 %v345
        %v623 = vunpack.c.l.b16 %v346
        %v624 = vunpack.c.h.b16 %v346
        %v625 = vunpack.c.l.b16 %v347
        %v626 = vpack.c.b16 %v521, %v514
        %v627 = vpack.c.b16 %v522, %v515
        %v628 = vpack.c.b16 %v523, %v516
        %v629 = vpack.c.b16 %v524, %v517
        %v630 = vpack.c.b16 %v525, %v518
        %v631 = vpack.c.b16 %v526, %v519
        %v632 = vpack.c.b16 %v527, %v520
        %v633 = vpack.c.b16 %v535, %v528
        %v634 = vpack.c.b16 %v536, %v529
        %v635 = vpack.c.b16 %v537, %v530
        %v636 = vpack.c.b16 %v538, %v531
        %v637 = vpack.c.b16 %v539, %v532
        %v638 = vpack.c.b16 %v540, %v533
        %v639 = vpack.c.b16 %v541, %v534
        %v640 = vpack.c.b16 %v549, %v542
        %v641 = vpack.c.b16 %v550, %v543
        %v642 = vpack.c.b16 %v551, %v544
        %v643 = vpack.c.b16 %v552, %v545
        %v644 = vpack.c.b16 %v553, %v546
        %v645 = vpack.c.b16 %v554, %v547
        %v646 = vpack.c.b16 %v555, %v548
        %v647 = vpack.c.b16 %v563, %v556
        %v648 = vpack.c.b16 %v564, %v557
        %v649 = vpack.c.b16 %v565, %v558
        %v650 = vpack.c.b16 %v566, %v559
        %v651 = vpack.c.b16 %v567, %v560
        %v652 = vpack.c.b16 %v568, %v561
        %v653 = vpack.c.b16 %v569, %v562
        %v654 = vpack.c.b16 %v577, %v570
        %v655 = vpack.c.b16 %v578, %v571
        %v656 = vpack.c.b16 %v579, %v572
        %v657 = vpack.c.b16 %v580, %v573
        %v658 = vpack.c.b16 %v581, %v574
        %v659 = vpack.c.b16 %v582, %v575
        %v660 = vpack.c.b16 %v583, %v576
        %v661 = vpack.c.b16 %v591, %v584
        %v662 = vpack.c.b16 %v592, %v585
        %v663 = vpack.c.b16 %v593, %v586
        %v664 = vpack.c.b16 %v594, %v587
        %v665 = vpack.c.b16 %v595, %v588
        %v666 = vpack.c.b16 %v596, %v589
        %v667 = vpack.c.b16 %v597, %v590
        %v668 = vpack.c.b16 %v605, %v598
        %v669 = vpack.c.b16 %v606, %v599
        %v670 = vpack.c.b16 %v607, %v600
        %v671 = vpack.c.b16 %v608, %v601
        %v672 = vpack.c.b16 %v609, %v602
        %v673 = vpack.c.b16 %v610, %v603
        %v674 = vpack.c.b16 %v611, %v604
        %v675 = vpack.c.b16 %v619, %v612
        %v676 = vpack.c.b16 %v620, %v613
        %v677 = vpack.c.b16 %v621, %v614
        %v678 = vpack.c.b16 %v622, %v615
        %v679 = vpack.c.b16 %v623, %v616
        %v680 = vpack.c.b16 %v624, %v617
        %v681 = vpack.c.b16 %v625, %v618
        %v828 = vunpack.c.l.b16 %v348
        %v829 = vunpack.c.l.b16 %v349
        %v830 = vunpack.c.l.b16 %v350
        %v831 = vunpack.c.l.b16 %v351
        %v832 = vunpack.c.l.b16 %v352
        %v833 = vunpack.c.l.b16 %v353
        %v834 = vunpack.c.l.b16 %v354
        %v835 = vunpack.c.l.b16 %v355
        %v836 = vunpack.c.l.b16 %v356
        %v837 = vunpack.c.l.b16 %v357
        %v838 = vunpack.c.l.b16 %v358
        %v839 = vunpack.c.l.b16 %v359
        %v840 = vunpack.c.l.b16 %v360
        %v841 = vunpack.c.l.b16 %v361
        %v842 = vunpack.c.l.b16 %v362
        %v843 = vunpack.c.l.b16 %v363
        %v844 = vunpack.c.l.b16 %v364
        %v845 = vunpack.c.l.b16 %v365
        %v846 = vunpack.c.l.b16 %v366
        %v847 = vunpack.c.l.b16 %v367
        %v848 = vunpack.c.l.b16 %v368
        %v849 = vunpack.c.l.b16 %v369
        %v850 = vunpack.c.l.b16 %v370
        %v851 = vunpack.c.l.b16 %v371
        %v852 = vunpack.c.l.b16 %v372
        %v853 = vunpack.c.l.b16 %v373
        %v854 = vunpack.c.l.b16 %v374
        %v855 = vunpack.c.l.b16 %v375
        %v856 = vunpack.c.l.b16 %v376
        %v857 = vunpack.c.l.b16 %v377
        %v858 = vunpack.c.l.b16 %v378
        %v859 = vunpack.c.l.b16 %v379
        %v860 = vunpack.c.l.b16 %v380
        %v861 = vunpack.c.l.b16 %v381
        %v862 = vunpack.c.l.b16 %v382
        %v863 = vunpack.c.l.b16 %v383
        %v864 = vunpack.c.l.b16 %v384
        %v865 = vunpack.c.l.b16 %v385
        %v866 = vunpack.c.l.b16 %v386
        %v867 = vunpack.c.l.b16 %v387
        %v868 = vunpack.c.l.b16 %v388
        %v869 = vunpack.c.l.b16 %v389
        %v870 = vunpack.c.l.b16 %v390
        %v871 = vunpack.c.l.b16 %v391
        %v872 = vunpack.c.l.b16 %v392
        %v873 = vunpack.c.l.b16 %v393
        %v874 = vunpack.c.l.b16 %v394
        %v875 = vunpack.c.l.b16 %v395
        %v876 = vunpack.c.l.b16 %v396
        %v877 = vunpack.c.l.b16 %v397
        %v878 = vunpack.c.l.b16 %v398
        %v879 = vunpack.c.l.b16 %v399
        %v880 = vunpack.c.l.b16 %v400
        %v881 = vunpack.c.l.b16 %v401
        %v882 = vunpack.c.l.b16 %v402
        %v883 = vunpack.c.l.b16 %v403
        %v884 = vunpack.c.l.b16 %v404
        %v885 = vunpack.c.l.b16 %v405
        %v886 = vunpack.c.l.b16 %v406
        %v887 = vunpack.c.l.b16 %v407
        %v888 = vunpack.c.l.b16 %v408
        %v889 = vunpack.c.l.b16 %v409
        %v890 = vunpack.c.l.b16 %v410
        %v891 = vunpack.c.l.b16 %v411
        %v892 = vunpack.c.l.b16 %v412
        %v893 = vunpack.c.l.b16 %v413
        %v894 = vunpack.c.l.b16 %v414
        %v895 = vunpack.c.l.b16 %v415
        %v896 = vunpack.c.l.b16 %v416
        %v897 = vunpack.c.l.b16 %v417
        %v898 = vunpack.c.l.b16 %v418
        %v899 = vunpack.c.l.b16 %v419
        %v900 = vunpack.c.l.b16 %v420
        %v901 = vunpack.c.l.b16 %v421
        %v902 = vunpack.c.l.b16 %v422
        %v903 = vunpack.c.l.b16 %v423
        %v904 = vunpack.c.l.b16 %v424
        %v905 = vunpack.c.l.b16 %v425
        %v906 = vunpack.c.l.b16 %v426
        %v907 = vunpack.c.l.b16 %v427
        %v908 = vunpack.c.l.b16 %v428
        %v909 = vunpack.c.l.b16 %v429
        %v910 = vunpack.c.l.b16 %v430
        %v911 = vunpack.c.l.b16 %v431
        %v912 = vunpack.c.l.b16 %v432
        %v913 = vunpack.c.l.b16 %v433
        %v914 = vunpack.c.l.b16 %v434
        %v915 = vunpack.c.l.b16 %v435
        %v916 = vunpack.c.l.b16 %v436
        %v917 = vunpack.c.l.b16 %v437
        %v918 = vunpack.c.l.b16 %v438
        %v919 = vunpack.c.l.b16 %v439
        %v920 = vunpack.c.l.b16 %v440
        %v921 = vunpack.c.l.b16 %v441
        %v922 = vunpack.c.l.b16 %v442
        %v923 = vunpack.c.l.b16 %v443
        %v924 = vunpack.c.l.b16 %v444
        %v925 = vunpack.c.l.b16 %v445
        %v926 = vpack.c.b16 %v829, %v828
        %v927 = vpack.c.b16 %v831, %v830
        %v928 = vpack.c.b16 %v833, %v832
        %v929 = vpack.c.b16 %v835, %v834
        %v930 = vpack.c.b16 %v837, %v836
        %v931 = vpack.c.b16 %v839, %v838
        %v932 = vpack.c.b16 %v841, %v840
        %v933 = vpack.c.b16 %v843, %v842
        %v934 = vpack.c.b16 %v845, %v844
        %v935 = vpack.c.b16 %v847, %v846
        %v936 = vpack.c.b16 %v849, %v848
        %v937 = vpack.c.b16 %v851, %v850
        %v938 = vpack.c.b16 %v853, %v852
        %v939 = vpack.c.b16 %v855, %v854
        %v940 = vpack.c.b16 %v857, %v856
        %v941 = vpack.c.b16 %v859, %v858
        %v942 = vpack.c.b16 %v861, %v860
        %v943 = vpack.c.b16 %v863, %v862
        %v944 = vpack.c.b16 %v865, %v864
        %v945 = vpack.c.b16 %v867, %v866
        %v946 = vpack.c.b16 %v869, %v868
        %v947 = vpack.c.b16 %v871, %v870
        %v948 = vpack.c.b16 %v873, %v872
        %v949 = vpack.c.b16 %v875, %v874
        %v950 = vpack.c.b16 %v877, %v876
        %v951 = vpack.c.b16 %v879, %v878
        %v952 = vpack.c.b16 %v881, %v880
        %v953 = vpack.c.b16 %v883, %v882
        %v954 = vpack.c.b16 %v885, %v884
        %v955 = vpack.c.b16 %v887, %v886
        %v956 = vpack.c.b16 %v889, %v888
        %v957 = vpack.c.b16 %v891, %v890
        %v958 = vpack.c.b16 %v893, %v892
        %v959 = vpack.c.b16 %v895, %v894
        %v960 = vpack.c.b16 %v897, %v896
        %v961 = vpack.c.b16 %v899, %v898
        %v962 = vpack.c.b16 %v901, %v900
        %v963 = vpack.c.b16 %v903, %v902
        %v964 = vpack.c.b16 %v905, %v904
        %v965 = vpack.c.b16 %v907, %v906
        %v966 = vpack.c.b16 %v909, %v908
        %v967 = vpack.c.b16 %v911, %v910
        %v968 = vpack.c.b16 %v913, %v912
        %v969 = vpack.c.b16 %v915, %v914
        %v970 = vpack.c.b16 %v917, %v916
        %v971 = vpack.c.b16 %v919, %v918
        %v972 = vpack.c.b16 %v921, %v920
        %v973 = vpack.c.b16 %v923, %v922
        %v974 = vpack.c.b16 %v925, %v924
        %vm1024 = vcmask 130048
        %v1026 = vsel %vm1024, %v632, 0
        %v1029 = vsel %vm1024, %v639, 0
        %v1032 = vsel %vm1024, %v646, 0
        %v1035 = vsel %vm1024, %v653, 0
        %v1038 = vsel %vm1024, %v660, 0
        %v1041 = vsel %vm1024, %v667, 0
        %v1044 = vsel %vm1024, %v674, 0
        %v1047 = vsel %vm1024, %v681, 0
        %1049 = vmatpush.bf16.msra.mxu0 %v933
        %1050 = vmatpush.bf16.msra.mxu0 %v932
        %1051 = vmatpush.bf16.msra.mxu0 %v931
        %1052 = vmatpush.bf16.msra.mxu0 %v930
        %1053 = vmatpush.bf16.msra.mxu0 %v929
        %1054 = vmatpush.bf16.msra.mxu0 %v928
        %1055 = vmatpush.bf16.msra.mxu0 %v927
        %1056 = vmatpush.bf16.msra.mxu0 %v926
        %1057 = vmatmul.bf16.gmra.mxu0 %v626
        %v1058 = vpop.f32.mrf.mxu0
        %v1059 = vadd.f32 %v448, %v1058
        %v1060 = vpop.f32.mrf.mxu0
        %v1061 = vadd.f32 %v448, %v1060
        %1062 = vmatmul.bf16.gmra.mxu0 %v633
        %v1063 = vpop.f32.mrf.mxu0
        %v1064 = vadd.f32 %v448, %v1063
        %v1065 = vpop.f32.mrf.mxu0
        %v1066 = vadd.f32 %v448, %v1065
        %1067 = vmatmul.bf16.gmra.mxu0 %v640
        %v1068 = vpop.f32.mrf.mxu0
        %v1069 = vadd.f32 %v448, %v1068
        %v1070 = vpop.f32.mrf.mxu0
        %v1071 = vadd.f32 %v448, %v1070
        %1072 = vmatmul.bf16.gmra.mxu0 %v647
        %v1073 = vpop.f32.mrf.mxu0
        %v1074 = vadd.f32 %v448, %v1073
        %v1075 = vpop.f32.mrf.mxu0
        %v1076 = vadd.f32 %v448, %v1075
        %1077 = vmatmul.bf16.gmra.mxu0 %v654
        %v1078 = vpop.f32.mrf.mxu0
        %v1079 = vadd.f32 %v448, %v1078
        %v1080 = vpop.f32.mrf.mxu0
        %v1081 = vadd.f32 %v448, %v1080
        %1082 = vmatmul.bf16.gmra.mxu0 %v661
        %v1083 = vpop.f32.mrf.mxu0
        %v1084 = vadd.f32 %v448, %v1083
        %v1085 = vpop.f32.mrf.mxu0
        %v1086 = vadd.f32 %v448, %v1085
        %1087 = vmatmul.bf16.gmra.mxu0 %v668
        %v1088 = vpop.f32.mrf.mxu0
        %v1089 = vadd.f32 %v448, %v1088
        %v1090 = vpop.f32.mrf.mxu0
        %v1091 = vadd.f32 %v448, %v1090
        %1092 = vmatmul.bf16.gmra.mxu0 %v675
        %v1093 = vpop.f32.mrf.mxu0
        %v1094 = vadd.f32 %v448, %v1093
        %v1095 = vpop.f32.mrf.mxu0
        %v1096 = vadd.f32 %v448, %v1095
        %1097 = vdwg.mxu0
        %1098 = vmatpush.bf16.msra.mxu0 %v941
        %1099 = vmatpush.bf16.msra.mxu0 %v940
        %1100 = vmatpush.bf16.msra.mxu0 %v939
        %1101 = vmatpush.bf16.msra.mxu0 %v938
        %1102 = vmatpush.bf16.msra.mxu0 %v937
        %1103 = vmatpush.bf16.msra.mxu0 %v936
        %1104 = vmatpush.bf16.msra.mxu0 %v935
        %1105 = vmatpush.bf16.msra.mxu0 %v934
        %1106 = vmatmul.bf16.gmra.mxu0 %v627
        %v1107 = vpop.f32.mrf.mxu0
        %v1108 = vadd.f32 %v1059, %v1107
        %v1109 = vpop.f32.mrf.mxu0
        %v1110 = vadd.f32 %v1061, %v1109
        %1111 = vmatmul.bf16.gmra.mxu0 %v634
        %v1112 = vpop.f32.mrf.mxu0
        %v1113 = vadd.f32 %v1064, %v1112
        %v1114 = vpop.f32.mrf.mxu0
        %v1115 = vadd.f32 %v1066, %v1114
        %1116 = vmatmul.bf16.gmra.mxu0 %v641
        %v1117 = vpop.f32.mrf.mxu0
        %v1118 = vadd.f32 %v1069, %v1117
        %v1119 = vpop.f32.mrf.mxu0
        %v1120 = vadd.f32 %v1071, %v1119
        %1121 = vmatmul.bf16.gmra.mxu0 %v648
        %v1122 = vpop.f32.mrf.mxu0
        %v1123 = vadd.f32 %v1074, %v1122
        %v1124 = vpop.f32.mrf.mxu0
        %v1125 = vadd.f32 %v1076, %v1124
        %1126 = vmatmul.bf16.gmra.mxu0 %v655
        %v1127 = vpop.f32.mrf.mxu0
        %v1128 = vadd.f32 %v1079, %v1127
        %v1129 = vpop.f32.mrf.mxu0
        %v1130 = vadd.f32 %v1081, %v1129
        %1131 = vmatmul.bf16.gmra.mxu0 %v662
        %v1132 = vpop.f32.mrf.mxu0
        %v1133 = vadd.f32 %v1084, %v1132
        %v1134 = vpop.f32.mrf.mxu0
        %v1135 = vadd.f32 %v1086, %v1134
        %1136 = vmatmul.bf16.gmra.mxu0 %v669
        %v1137 = vpop.f32.mrf.mxu0
        %v1138 = vadd.f32 %v1089, %v1137
        %v1139 = vpop.f32.mrf.mxu0
        %v1140 = vadd.f32 %v1091, %v1139
        %1141 = vmatmul.bf16.gmra.mxu0 %v676
        %v1142 = vpop.f32.mrf.mxu0
        %v1143 = vadd.f32 %v1094, %v1142
        %v1144 = vpop.f32.mrf.mxu0
        %v1145 = vadd.f32 %v1096, %v1144
        %1146 = vdwg.mxu0
        %1147 = vmatpush.bf16.msra.mxu0 %v949
        %1148 = vmatpush.bf16.msra.mxu0 %v948
        %1149 = vmatpush.bf16.msra.mxu0 %v947
        %1150 = vmatpush.bf16.msra.mxu0 %v946
        %1151 = vmatpush.bf16.msra.mxu0 %v945
        %1152 = vmatpush.bf16.msra.mxu0 %v944
        %1153 = vmatpush.bf16.msra.mxu0 %v943
        %1154 = vmatpush.bf16.msra.mxu0 %v942
        %1155 = vmatmul.bf16.gmra.mxu0 %v628
        %v1156 = vpop.f32.mrf.mxu0
        %v1157 = vadd.f32 %v1108, %v1156
        %v1158 = vpop.f32.mrf.mxu0
        %v1159 = vadd.f32 %v1110, %v1158
        %1160 = vmatmul.bf16.gmra.mxu0 %v635
        %v1161 = vpop.f32.mrf.mxu0
        %v1162 = vadd.f32 %v1113, %v1161
        %v1163 = vpop.f32.mrf.mxu0
        %v1164 = vadd.f32 %v1115, %v1163
        %1165 = vmatmul.bf16.gmra.mxu0 %v642
        %v1166 = vpop.f32.mrf.mxu0
        %v1167 = vadd.f32 %v1118, %v1166
        %v1168 = vpop.f32.mrf.mxu0
        %v1169 = vadd.f32 %v1120, %v1168
        %1170 = vmatmul.bf16.gmra.mxu0 %v649
        %v1171 = vpop.f32.mrf.mxu0
        %v1172 = vadd.f32 %v1123, %v1171
        %v1173 = vpop.f32.mrf.mxu0
        %v1174 = vadd.f32 %v1125, %v1173
        %1175 = vmatmul.bf16.gmra.mxu0 %v656
        %v1176 = vpop.f32.mrf.mxu0
        %v1177 = vadd.f32 %v1128, %v1176
        %v1178 = vpop.f32.mrf.mxu0
        %v1179 = vadd.f32 %v1130, %v1178
        %1180 = vmatmul.bf16.gmra.mxu0 %v663
        %v1181 = vpop.f32.mrf.mxu0
        %v1182 = vadd.f32 %v1133, %v1181
        %v1183 = vpop.f32.mrf.mxu0
        %v1184 = vadd.f32 %v1135, %v1183
        %1185 = vmatmul.bf16.gmra.mxu0 %v670
        %v1186 = vpop.f32.mrf.mxu0
        %v1187 = vadd.f32 %v1138, %v1186
        %v1188 = vpop.f32.mrf.mxu0
        %v1189 = vadd.f32 %v1140, %v1188
        %1190 = vmatmul.bf16.gmra.mxu0 %v677
        %v1191 = vpop.f32.mrf.mxu0
        %v1192 = vadd.f32 %v1143, %v1191
        %v1193 = vpop.f32.mrf.mxu0
        %v1194 = vadd.f32 %v1145, %v1193
        %1195 = vdwg.mxu0
        %1196 = vmatpush.bf16.msra.mxu0 %v957
        %1197 = vmatpush.bf16.msra.mxu0 %v956
        %1198 = vmatpush.bf16.msra.mxu0 %v955
        %1199 = vmatpush.bf16.msra.mxu0 %v954
        %1200 = vmatpush.bf16.msra.mxu0 %v953
        %1201 = vmatpush.bf16.msra.mxu0 %v952
        %1202 = vmatpush.bf16.msra.mxu0 %v951
        %1203 = vmatpush.bf16.msra.mxu0 %v950
        %1204 = vmatmul.bf16.gmra.mxu0 %v629
        %v1205 = vpop.f32.mrf.mxu0
        %v1206 = vadd.f32 %v1157, %v1205
        %v1207 = vpop.f32.mrf.mxu0
        %v1208 = vadd.f32 %v1159, %v1207
        %1209 = vmatmul.bf16.gmra.mxu0 %v636
        %v1210 = vpop.f32.mrf.mxu0
        %v1211 = vadd.f32 %v1162, %v1210
        %v1212 = vpop.f32.mrf.mxu0
        %v1213 = vadd.f32 %v1164, %v1212
        %1214 = vmatmul.bf16.gmra.mxu0 %v643
        %v1215 = vpop.f32.mrf.mxu0
        %v1216 = vadd.f32 %v1167, %v1215
        %v1217 = vpop.f32.mrf.mxu0
        %v1218 = vadd.f32 %v1169, %v1217
        %1219 = vmatmul.bf16.gmra.mxu0 %v650
        %v1220 = vpop.f32.mrf.mxu0
        %v1221 = vadd.f32 %v1172, %v1220
        %v1222 = vpop.f32.mrf.mxu0
        %v1223 = vadd.f32 %v1174, %v1222
        %1224 = vmatmul.bf16.gmra.mxu0 %v657
        %v1225 = vpop.f32.mrf.mxu0
        %v1226 = vadd.f32 %v1177, %v1225
        %v1227 = vpop.f32.mrf.mxu0
        %v1228 = vadd.f32 %v1179, %v1227
        %1229 = vmatmul.bf16.gmra.mxu0 %v664
        %v1230 = vpop.f32.mrf.mxu0
        %v1231 = vadd.f32 %v1182, %v1230
        %v1232 = vpop.f32.mrf.mxu0
        %v1233 = vadd.f32 %v1184, %v1232
        %1234 = vmatmul.bf16.gmra.mxu0 %v671
        %v1235 = vpop.f32.mrf.mxu0
        %v1236 = vadd.f32 %v1187, %v1235
        %v1237 = vpop.f32.mrf.mxu0
        %v1238 = vadd.f32 %v1189, %v1237
        %1239 = vmatmul.bf16.gmra.mxu0 %v678
        %v1240 = vpop.f32.mrf.mxu0
        %v1241 = vadd.f32 %v1192, %v1240
        %v1242 = vpop.f32.mrf.mxu0
        %v1243 = vadd.f32 %v1194, %v1242
        %1244 = vdwg.mxu0
        %1245 = vmatpush.bf16.msra.mxu0 %v965
        %1246 = vmatpush.bf16.msra.mxu0 %v964
        %1247 = vmatpush.bf16.msra.mxu0 %v963
        %1248 = vmatpush.bf16.msra.mxu0 %v962
        %1249 = vmatpush.bf16.msra.mxu0 %v961
        %1250 = vmatpush.bf16.msra.mxu0 %v960
        %1251 = vmatpush.bf16.msra.mxu0 %v959
        %1252 = vmatpush.bf16.msra.mxu0 %v958
        %1253 = vmatmul.bf16.gmra.mxu0 %v630
        %v1254 = vpop.f32.mrf.mxu0
        %v1255 = vadd.f32 %v1206, %v1254
        %v1256 = vpop.f32.mrf.mxu0
        %v1257 = vadd.f32 %v1208, %v1256
        %1258 = vmatmul.bf16.gmra.mxu0 %v637
        %v1259 = vpop.f32.mrf.mxu0
        %v1260 = vadd.f32 %v1211, %v1259
        %v1261 = vpop.f32.mrf.mxu0
        %v1262 = vadd.f32 %v1213, %v1261
        %1263 = vmatmul.bf16.gmra.mxu0 %v644
        %v1264 = vpop.f32.mrf.mxu0
        %v1265 = vadd.f32 %v1216, %v1264
        %v1266 = vpop.f32.mrf.mxu0
        %v1267 = vadd.f32 %v1218, %v1266
        %1268 = vmatmul.bf16.gmra.mxu0 %v651
        %v1269 = vpop.f32.mrf.mxu0
        %v1270 = vadd.f32 %v1221, %v1269
        %v1271 = vpop.f32.mrf.mxu0
        %v1272 = vadd.f32 %v1223, %v1271
        %1273 = vmatmul.bf16.gmra.mxu0 %v658
        %v1274 = vpop.f32.mrf.mxu0
        %v1275 = vadd.f32 %v1226, %v1274
        %v1276 = vpop.f32.mrf.mxu0
        %v1277 = vadd.f32 %v1228, %v1276
        %1278 = vmatmul.bf16.gmra.mxu0 %v665
        %v1279 = vpop.f32.mrf.mxu0
        %v1280 = vadd.f32 %v1231, %v1279
        %v1281 = vpop.f32.mrf.mxu0
        %v1282 = vadd.f32 %v1233, %v1281
        %1283 = vmatmul.bf16.gmra.mxu0 %v672
        %v1284 = vpop.f32.mrf.mxu0
        %v1285 = vadd.f32 %v1236, %v1284
        %v1286 = vpop.f32.mrf.mxu0
        %v1287 = vadd.f32 %v1238, %v1286
        %1288 = vmatmul.bf16.gmra.mxu0 %v679
        %v1289 = vpop.f32.mrf.mxu0
        %v1290 = vadd.f32 %v1241, %v1289
        %v1291 = vpop.f32.mrf.mxu0
        %v1292 = vadd.f32 %v1243, %v1291
        %1293 = vdwg.mxu0
        %1294 = vmatpush.bf16.msra.mxu0 %v973
        %1295 = vmatpush.bf16.msra.mxu0 %v972
        %1296 = vmatpush.bf16.msra.mxu0 %v971
        %1297 = vmatpush.bf16.msra.mxu0 %v970
        %1298 = vmatpush.bf16.msra.mxu0 %v969
        %1299 = vmatpush.bf16.msra.mxu0 %v968
        %1300 = vmatpush.bf16.msra.mxu0 %v967
        %1301 = vmatpush.bf16.msra.mxu0 %v966
        %1302 = vmatmul.bf16.gmra.mxu0 %v631
        %v1303 = vpop.f32.mrf.mxu0
        %v1304 = vadd.f32 %v1255, %v1303
        %v1305 = vpop.f32.mrf.mxu0
        %v1306 = vadd.f32 %v1257, %v1305
        %1307 = vmatmul.bf16.gmra.mxu0 %v638
        %v1308 = vpop.f32.mrf.mxu0
        %v1309 = vadd.f32 %v1260, %v1308
        %v1310 = vpop.f32.mrf.mxu0
        %v1311 = vadd.f32 %v1262, %v1310
        %1312 = vmatmul.bf16.gmra.mxu0 %v645
        %v1313 = vpop.f32.mrf.mxu0
        %v1314 = vadd.f32 %v1265, %v1313
        %v1315 = vpop.f32.mrf.mxu0
        %v1316 = vadd.f32 %v1267, %v1315
        %1317 = vmatmul.bf16.gmra.mxu0 %v652
        %v1318 = vpop.f32.mrf.mxu0
        %v1319 = vadd.f32 %v1270, %v1318
        %v1320 = vpop.f32.mrf.mxu0
        %v1321 = vadd.f32 %v1272, %v1320
        %1322 = vmatmul.bf16.gmra.mxu0 %v659
        %v1323 = vpop.f32.mrf.mxu0
        %v1324 = vadd.f32 %v1275, %v1323
        %v1325 = vpop.f32.mrf.mxu0
        %v1326 = vadd.f32 %v1277, %v1325
        %1327 = vmatmul.bf16.gmra.mxu0 %v666
        %v1328 = vpop.f32.mrf.mxu0
        %v1329 = vadd.f32 %v1280, %v1328
        %v1330 = vpop.f32.mrf.mxu0
        %v1331 = vadd.f32 %v1282, %v1330
        %1332 = vmatmul.bf16.gmra.mxu0 %v673
        %v1333 = vpop.f32.mrf.mxu0
        %v1334 = vadd.f32 %v1285, %v1333
        %v1335 = vpop.f32.mrf.mxu0
        %v1336 = vadd.f32 %v1287, %v1335
        %1337 = vmatmul.bf16.gmra.mxu0 %v680
        %v1338 = vpop.f32.mrf.mxu0
        %v1339 = vadd.f32 %v1290, %v1338
        %v1340 = vpop.f32.mrf.mxu0
        %v1341 = vadd.f32 %v1292, %v1340
        %1342 = vdwg.mxu0
        %1343 = vmatpush.bf16.msra.mxu0 0
        %1344 = vmatpush.bf16.msra.mxu0 0
        %1345 = vmatpush.bf16.msra.mxu0 0
        %1346 = vmatpush.bf16.msra.mxu0 0
        %1347 = vmatpush.bf16.msra.mxu0 0
        %1348 = vmatpush.bf16.msra.mxu0 0
        %1349 = vmatpush.bf16.msra.mxu0 0
        %1350 = vmatpush.bf16.msra.mxu0 %v974
        %1351 = vmatmul.bf16.gmra.mxu0 %v1026
        %v1352 = vpop.f32.mrf.mxu0
        %v1353 = vadd.f32 %v1304, %v1352
        %v1354 = vpop.f32.mrf.mxu0
        %v1355 = vadd.f32 %v1306, %v1354
        %1356 = vmatmul.bf16.gmra.mxu0 %v1029
        %v1357 = vpop.f32.mrf.mxu0
        %v1358 = vadd.f32 %v1309, %v1357
        %v1359 = vpop.f32.mrf.mxu0
        %v1360 = vadd.f32 %v1311, %v1359
        %1361 = vmatmul.bf16.gmra.mxu0 %v1032
        %v1362 = vpop.f32.mrf.mxu0
        %v1363 = vadd.f32 %v1314, %v1362
        %v1364 = vpop.f32.mrf.mxu0
        %v1365 = vadd.f32 %v1316, %v1364
        %1366 = vmatmul.bf16.gmra.mxu0 %v1035
        %v1367 = vpop.f32.mrf.mxu0
        %v1368 = vadd.f32 %v1319, %v1367
        %v1369 = vpop.f32.mrf.mxu0
        %v1370 = vadd.f32 %v1321, %v1369
        %1371 = vmatmul.bf16.gmra.mxu0 %v1038
        %v1372 = vpop.f32.mrf.mxu0
        %v1373 = vadd.f32 %v1324, %v1372
        %v1374 = vpop.f32.mrf.mxu0
        %v1375 = vadd.f32 %v1326, %v1374
        %1376 = vmatmul.bf16.gmra.mxu0 %v1041
        %v1377 = vpop.f32.mrf.mxu0
        %v1378 = vadd.f32 %v1329, %v1377
        %v1379 = vpop.f32.mrf.mxu0
        %v1380 = vadd.f32 %v1331, %v1379
        %1381 = vmatmul.bf16.gmra.mxu0 %v1044
        %v1382 = vpop.f32.mrf.mxu0
        %v1383 = vadd.f32 %v1334, %v1382
        %v1384 = vpop.f32.mrf.mxu0
        %v1385 = vadd.f32 %v1336, %v1384
        %1386 = vmatmul.bf16.gmra.mxu0 %v1047
        %v1387 = vpop.f32.mrf.mxu0
        %v1388 = vadd.f32 %v1339, %v1387
        %v1389 = vpop.f32.mrf.mxu0
        %v1390 = vadd.f32 %v1341, %v1389
        %1391 = vdwg.mxu0
        %v1392 = vmax.f32 %v1353, 0.0
        %v1393 = vmax.f32 %v1355, 0.0
        %v1394 = vmax.f32 %v1358, 0.0
        %v1395 = vmax.f32 %v1360, 0.0
        %v1396 = vmax.f32 %v1363, 0.0
        %v1397 = vmax.f32 %v1365, 0.0
        %v1398 = vmax.f32 %v1368, 0.0
        %v1399 = vmax.f32 %v1370, 0.0
        %v1400 = vmax.f32 %v1373, 0.0
        %v1401 = vmax.f32 %v1375, 0.0
        %v1402 = vmax.f32 %v1378, 0.0
        %v1403 = vmax.f32 %v1380, 0.0
        %v1404 = vmax.f32 %v1383, 0.0
        %v1405 = vmax.f32 %v1385, 0.0
        %v1406 = vmax.f32 %v1388, 0.0
        %v1407 = vmax.f32 %v1390, 0.0
        %v1408 = vpack.c.bf16 %v1393, %v1392
        %v1409 = vpack.c.bf16 %v1395, %v1394
        %v1410 = vpack.c.bf16 %v1397, %v1396
        %v1411 = vpack.c.bf16 %v1399, %v1398
        %v1412 = vpack.c.bf16 %v1401, %v1400
        %v1413 = vpack.c.bf16 %v1403, %v1402
        %v1414 = vpack.c.bf16 %v1405, %v1404
        %v1415 = vpack.c.bf16 %v1407, %v1406
        %v1416 = vld [vmem:[%s3] sm:$0xf]
        %v1417 = vld [vmem:[%s3 + $0x4] sm:$0xf]
        %v1418 = vld [vmem:[%s3 + $0x8] sm:$0xf]
        %v1419 = vld [vmem:[%s3 + $0xc] sm:$0xf]
        %v1420 = vld [vmem:[%s3 + $0x10] sm:$0xf]
        %v1421 = vld [vmem:[%s3 + $0x14] sm:$0xf]
        %v1422 = vld [vmem:[%s3 + $0x18] sm:$0xf]
        %v1423 = vld [vmem:[%s3 + $0x1c] sm:$0xf]
        %v1424 = vld [vmem:[%s3 + $0x20] sm:$0xf]
        %v1425 = vld [vmem:[%s3 + $0x24] sm:$0xf]
        %v1426 = vld [vmem:[%s3 + $0x28] sm:$0xf]
        %v1427 = vld [vmem:[%s3 + $0x2c] sm:$0xf]
        %v1428 = vld [vmem:[%s3 + $0x30] sm:$0xf]
        %v1429 = vld [vmem:[%s3 + $0x34] sm:$0xf]
        %v1430 = vld [vmem:[%s3 + $0x38] sm:$0xf]
        %v1431 = vld [vmem:[%s3 + $0x3c] sm:$0xf]
        %v1432 = vld [vmem:[%s4] sm:$0x1]
        %v1434 = vperm.slane %v1432, 0
        %v1452 = vunpack.c.l.b16 %v1416
        %v1453 = vunpack.c.l.b16 %v1417
        %v1454 = vunpack.c.l.b16 %v1418
        %v1455 = vunpack.c.l.b16 %v1419
        %v1456 = vunpack.c.l.b16 %v1420
        %v1457 = vunpack.c.l.b16 %v1421
        %v1458 = vunpack.c.l.b16 %v1422
        %v1459 = vunpack.c.l.b16 %v1423
        %v1460 = vunpack.c.l.b16 %v1424
        %v1461 = vunpack.c.l.b16 %v1425
        %v1462 = vunpack.c.l.b16 %v1426
        %v1463 = vunpack.c.l.b16 %v1427
        %v1464 = vunpack.c.l.b16 %v1428
        %v1465 = vunpack.c.l.b16 %v1429
        %v1466 = vunpack.c.l.b16 %v1430
        %v1467 = vunpack.c.l.b16 %v1431
        %v1468 = vpack.c.b16 %v1453, %v1452
        %v1469 = vpack.c.b16 %v1455, %v1454
        %v1470 = vpack.c.b16 %v1457, %v1456
        %v1471 = vpack.c.b16 %v1459, %v1458
        %v1472 = vpack.c.b16 %v1461, %v1460
        %v1473 = vpack.c.b16 %v1463, %v1462
        %v1474 = vpack.c.b16 %v1465, %v1464
        %v1475 = vpack.c.b16 %v1467, %v1466
        %1484 = vmatpush.bf16.msra.mxu0 %v1475
        %1485 = vmatpush.bf16.msra.mxu0 %v1474
        %1486 = vmatpush.bf16.msra.mxu0 %v1473
        %1487 = vmatpush.bf16.msra.mxu0 %v1472
        %1488 = vmatpush.bf16.msra.mxu0 %v1471
        %1489 = vmatpush.bf16.msra.mxu0 %v1470
        %1490 = vmatpush.bf16.msra.mxu0 %v1469
        %1491 = vmatpush.bf16.msra.mxu0 %v1468
        %1492 = vmatmul.bf16.gmra.mxu0 %v1408
        %v1493 = vpop.f32.mrf.mxu0
        %v1494 = vadd.f32 %v1434, %v1493
        %v1495 = vpop.f32.mrf.mxu0
        %v1496 = vadd.f32 %v1434, %v1495
        %1497 = vmatmul.bf16.gmra.mxu0 %v1409
        %v1498 = vpop.f32.mrf.mxu0
        %v1499 = vadd.f32 %v1434, %v1498
        %v1500 = vpop.f32.mrf.mxu0
        %v1501 = vadd.f32 %v1434, %v1500
        %1502 = vmatmul.bf16.gmra.mxu0 %v1410
        %v1503 = vpop.f32.mrf.mxu0
        %v1504 = vadd.f32 %v1434, %v1503
        %v1505 = vpop.f32.mrf.mxu0
        %v1506 = vadd.f32 %v1434, %v1505
        %1507 = vmatmul.bf16.gmra.mxu0 %v1411
        %v1508 = vpop.f32.mrf.mxu0
        %v1509 = vadd.f32 %v1434, %v1508
        %v1510 = vpop.f32.mrf.mxu0
        %v1511 = vadd.f32 %v1434, %v1510
        %1512 = vmatmul.bf16.gmra.mxu0 %v1412
        %v1513 = vpop.f32.mrf.mxu0
        %v1514 = vadd.f32 %v1434, %v1513
        %v1515 = vpop.f32.mrf.mxu0
        %v1516 = vadd.f32 %v1434, %v1515
        %1517 = vmatmul.bf16.gmra.mxu0 %v1413
        %v1518 = vpop.f32.mrf.mxu0
        %v1519 = vadd.f32 %v1434, %v1518
        %v1520 = vpop.f32.mrf.mxu0
        %v1521 = vadd.f32 %v1434, %v1520
        %1522 = vmatmul.bf16.gmra.mxu0 %v1414
        %v1523 = vpop.f32.mrf.mxu0
        %v1524 = vadd.f32 %v1434, %v1523
        %v1525 = vpop.f32.mrf.mxu0
        %v1526 = vadd.f32 %v1434, %v1525
        %1527 = vmatmul.bf16.gmra.mxu0 %v1415
        %v1528 = vpop.f32.mrf.mxu0
        %v1529 = vadd.f32 %v1434, %v1528
        %v1530 = vpop.f32.mrf.mxu0
        %v1531 = vadd.f32 %v1434, %v1530
        %1532 = vdwg.mxu0
        %v1533 = vmax.f32 %v1494, 0.0
        %v1534 = vmax.f32 %v1496, 0.0
        %v1535 = vmax.f32 %v1499, 0.0
        %v1536 = vmax.f32 %v1501, 0.0
        %v1537 = vmax.f32 %v1504, 0.0
        %v1538 = vmax.f32 %v1506, 0.0
        %v1539 = vmax.f32 %v1509, 0.0
        %v1540 = vmax.f32 %v1511, 0.0
        %v1541 = vmax.f32 %v1514, 0.0
        %v1542 = vmax.f32 %v1516, 0.0
        %v1543 = vmax.f32 %v1519, 0.0
        %v1544 = vmax.f32 %v1521, 0.0
        %v1545 = vmax.f32 %v1524, 0.0
        %v1546 = vmax.f32 %v1526, 0.0
        %v1547 = vmax.f32 %v1529, 0.0
        %v1548 = vmax.f32 %v1531, 0.0
        %v1549 = vpack.c.bf16 %v1534, %v1533
        %v1550 = vpack.c.bf16 %v1536, %v1535
        %v1551 = vpack.c.bf16 %v1538, %v1537
        %v1552 = vpack.c.bf16 %v1540, %v1539
        %v1553 = vpack.c.bf16 %v1542, %v1541
        %v1554 = vpack.c.bf16 %v1544, %v1543
        %v1555 = vpack.c.bf16 %v1546, %v1545
        %v1556 = vpack.c.bf16 %v1548, %v1547
        %v1557 = vld [vmem:[%s5] sm:$0xf]
        %v1558 = vld [vmem:[%s5 + $0x4] sm:$0xf]
        %v1559 = vld [vmem:[%s5 + $0x8] sm:$0xf]
        %v1560 = vld [vmem:[%s5 + $0xc] sm:$0xf]
        %v1561 = vld [vmem:[%s5 + $0x10] sm:$0xf]
        %v1562 = vld [vmem:[%s5 + $0x14] sm:$0xf]
        %v1563 = vld [vmem:[%s5 + $0x18] sm:$0xf]
        %v1564 = vld [vmem:[%s5 + $0x1c] sm:$0xf]
        %v1565 = vld [vmem:[%s6] sm:$0x1]
        %v1567 = vperm.slane %v1565, 0
        %v1577 = vunpack.c.l.b16 %v1557
        %v1578 = vunpack.c.l.b16 %v1558
        %v1579 = vunpack.c.l.b16 %v1559
        %v1580 = vunpack.c.l.b16 %v1560
        %v1581 = vunpack.c.l.b16 %v1561
        %v1582 = vunpack.c.l.b16 %v1562
        %v1583 = vunpack.c.l.b16 %v1563
        %v1584 = vunpack.c.l.b16 %v1564
        %v1585 = vpack.c.b16 %v1578, %v1577
        %v1586 = vpack.c.b16 %v1580, %v1579
        %v1587 = vpack.c.b16 %v1582, %v1581
        %v1588 = vpack.c.b16 %v1584, %v1583
        %vm1593 = vcmask 523264
        %v1595 = vsel %vm1593, %v1549, 0
        %v1598 = vsel %vm1593, %v1550, 0
        %v1601 = vsel %vm1593, %v1551, 0
        %v1604 = vsel %vm1593, %v1552, 0
        %v1607 = vsel %vm1593, %v1553, 0
        %v1610 = vsel %vm1593, %v1554, 0
        %v1613 = vsel %vm1593, %v1555, 0
        %v1616 = vsel %vm1593, %v1556, 0
        %1618 = vmatpush.bf16.msra.mxu0 0
        %1619 = vmatpush.bf16.msra.mxu0 0
        %1620 = vmatpush.bf16.msra.mxu0 0
        %1621 = vmatpush.bf16.msra.mxu0 0
        %1622 = vmatpush.bf16.msra.mxu0 %v1588
        %1623 = vmatpush.bf16.msra.mxu0 %v1587
        %1624 = vmatpush.bf16.msra.mxu0 %v1586
        %1625 = vmatpush.bf16.msra.mxu0 %v1585
        %1626 = vmatmul.bf16.gmra.mxu0 %v1595
        %v1627 = vpop.f32.mrf.mxu0
        %v1628 = vadd.f32 %v1567, %v1627
        %v1629 = vpop.f32.mrf.mxu0
        %v1630 = vadd.f32 %v1567, %v1629
        %1631 = vmatmul.bf16.gmra.mxu0 %v1598
        %v1632 = vpop.f32.mrf.mxu0
        %v1633 = vadd.f32 %v1567, %v1632
        %v1634 = vpop.f32.mrf.mxu0
        %v1635 = vadd.f32 %v1567, %v1634
        %1636 = vmatmul.bf16.gmra.mxu0 %v1601
        %v1637 = vpop.f32.mrf.mxu0
        %v1638 = vadd.f32 %v1567, %v1637
        %v1639 = vpop.f32.mrf.mxu0
        %v1640 = vadd.f32 %v1567, %v1639
        %1641 = vmatmul.bf16.gmra.mxu0 %v1604
        %v1642 = vpop.f32.mrf.mxu0
        %v1643 = vadd.f32 %v1567, %v1642
        %v1644 = vpop.f32.mrf.mxu0
        %v1645 = vadd.f32 %v1567, %v1644
        %1646 = vmatmul.bf16.gmra.mxu0 %v1607
        %v1647 = vpop.f32.mrf.mxu0
        %v1648 = vadd.f32 %v1567, %v1647
        %v1649 = vpop.f32.mrf.mxu0
        %v1650 = vadd.f32 %v1567, %v1649
        %1651 = vmatmul.bf16.gmra.mxu0 %v1610
        %v1652 = vpop.f32.mrf.mxu0
        %v1653 = vadd.f32 %v1567, %v1652
        %v1654 = vpop.f32.mrf.mxu0
        %v1655 = vadd.f32 %v1567, %v1654
        %1656 = vmatmul.bf16.gmra.mxu0 %v1613
        %v1657 = vpop.f32.mrf.mxu0
        %v1658 = vadd.f32 %v1567, %v1657
        %v1659 = vpop.f32.mrf.mxu0
        %v1660 = vadd.f32 %v1567, %v1659
        %1661 = vmatmul.bf16.gmra.mxu0 %v1616
        %v1662 = vpop.f32.mrf.mxu0
        %v1663 = vadd.f32 %v1567, %v1662
        %v1664 = vpop.f32.mrf.mxu0
        %v1665 = vadd.f32 %v1567, %v1664
        %1666 = vdwg.mxu0
        %1667 = vmax.xlane.f32.xlu0 %v1628
        %v1668 = vpop.xlane.xlu0 %1667
        %1669 = vmax.xlane.f32.xlu0 %v1630
        %v1670 = vpop.xlane.xlu0 %1669
        %1671 = vmax.xlane.f32.xlu0 %v1633
        %v1672 = vpop.xlane.xlu0 %1671
        %1673 = vmax.xlane.f32.xlu0 %v1635
        %v1674 = vpop.xlane.xlu0 %1673
        %1675 = vmax.xlane.f32.xlu0 %v1638
        %v1676 = vpop.xlane.xlu0 %1675
        %1677 = vmax.xlane.f32.xlu0 %v1640
        %v1678 = vpop.xlane.xlu0 %1677
        %1679 = vmax.xlane.f32.xlu0 %v1643
        %v1680 = vpop.xlane.xlu0 %1679
        %1681 = vmax.xlane.f32.xlu0 %v1645
        %v1682 = vpop.xlane.xlu0 %1681
        %1683 = vmax.xlane.f32.xlu0 %v1648
        %v1684 = vpop.xlane.xlu0 %1683
        %1685 = vmax.xlane.f32.xlu0 %v1650
        %v1686 = vpop.xlane.xlu0 %1685
        %1687 = vmax.xlane.f32.xlu0 %v1653
        %v1688 = vpop.xlane.xlu0 %1687
        %1689 = vmax.xlane.f32.xlu0 %v1655
        %v1690 = vpop.xlane.xlu0 %1689
        %1691 = vmax.xlane.f32.xlu0 %v1658
        %v1692 = vpop.xlane.xlu0 %1691
        %1693 = vmax.xlane.f32.xlu0 %v1660
        %v1694 = vpop.xlane.xlu0 %1693
        %1695 = vmax.xlane.f32.xlu0 %v1663
        %v1696 = vpop.xlane.xlu0 %1695
        %1697 = vmax.xlane.f32.xlu0 %v1665
        %v1698 = vpop.xlane.xlu0 %1697
        %v1699 = vsub.f32 %v1628, %v1668
        %v1700 = vsub.f32 %v1630, %v1670
        %v1701 = vsub.f32 %v1633, %v1672
        %v1702 = vsub.f32 %v1635, %v1674
        %v1703 = vsub.f32 %v1638, %v1676
        %v1704 = vsub.f32 %v1640, %v1678
        %v1705 = vsub.f32 %v1643, %v1680
        %v1706 = vsub.f32 %v1645, %v1682
        %v1707 = vsub.f32 %v1648, %v1684
        %v1708 = vsub.f32 %v1650, %v1686
        %v1709 = vsub.f32 %v1653, %v1688
        %v1710 = vsub.f32 %v1655, %v1690
        %v1711 = vsub.f32 %v1658, %v1692
        %v1712 = vsub.f32 %v1660, %v1694
        %v1713 = vsub.f32 %v1663, %v1696
        %v1714 = vsub.f32 %v1665, %v1698
        %v1715 = vmul.f32 %v1699, 1.442695
        %v1716 = vpow.pop %v1715
        %v1717 = vmul.f32 %v1700, 1.442695
        %v1718 = vpow.pop %v1717
        %v1719 = vmul.f32 %v1701, 1.442695
        %v1720 = vpow.pop %v1719
        %v1721 = vmul.f32 %v1702, 1.442695
        %v1722 = vpow.pop %v1721
        %v1723 = vmul.f32 %v1703, 1.442695
        %v1724 = vpow.pop %v1723
        %v1725 = vmul.f32 %v1704, 1.442695
        %v1726 = vpow.pop %v1725
        %v1727 = vmul.f32 %v1705, 1.442695
        %v1728 = vpow.pop %v1727
        %v1729 = vmul.f32 %v1706, 1.442695
        %v1730 = vpow.pop %v1729
        %v1731 = vmul.f32 %v1707, 1.442695
        %v1732 = vpow.pop %v1731
        %v1733 = vmul.f32 %v1708, 1.442695
        %v1734 = vpow.pop %v1733
        %v1735 = vmul.f32 %v1709, 1.442695
        %v1736 = vpow.pop %v1735
        %v1737 = vmul.f32 %v1710, 1.442695
        %v1738 = vpow.pop %v1737
        %v1739 = vmul.f32 %v1711, 1.442695
        %v1740 = vpow.pop %v1739
        %v1741 = vmul.f32 %v1712, 1.442695
        %v1742 = vpow.pop %v1741
        %v1743 = vmul.f32 %v1713, 1.442695
        %v1744 = vpow.pop %v1743
        %v1745 = vmul.f32 %v1714, 1.442695
        %v1746 = vpow.pop %v1745
        %1747 = vadd.xlane.f32.xlu0 %v1716
        %v1748 = vpop.xlane.xlu0 %1747
        %1749 = vadd.xlane.f32.xlu0 %v1718
        %v1750 = vpop.xlane.xlu0 %1749
        %1751 = vadd.xlane.f32.xlu0 %v1720
        %v1752 = vpop.xlane.xlu0 %1751
        %1753 = vadd.xlane.f32.xlu0 %v1722
        %v1754 = vpop.xlane.xlu0 %1753
        %1755 = vadd.xlane.f32.xlu0 %v1724
        %v1756 = vpop.xlane.xlu0 %1755
        %1757 = vadd.xlane.f32.xlu0 %v1726
        %v1758 = vpop.xlane.xlu0 %1757
        %1759 = vadd.xlane.f32.xlu0 %v1728
        %v1760 = vpop.xlane.xlu0 %1759
        %1761 = vadd.xlane.f32.xlu0 %v1730
        %v1762 = vpop.xlane.xlu0 %1761
        %1763 = vadd.xlane.f32.xlu0 %v1732
        %v1764 = vpop.xlane.xlu0 %1763
        %1765 = vadd.xlane.f32.xlu0 %v1734
        %v1766 = vpop.xlane.xlu0 %1765
        %1767 = vadd.xlane.f32.xlu0 %v1736
        %v1768 = vpop.xlane.xlu0 %1767
        %1769 = vadd.xlane.f32.xlu0 %v1738
        %v1770 = vpop.xlane.xlu0 %1769
        %1771 = vadd.xlane.f32.xlu0 %v1740
        %v1772 = vpop.xlane.xlu0 %1771
        %1773 = vadd.xlane.f32.xlu0 %v1742
        %v1774 = vpop.xlane.xlu0 %1773
        %1775 = vadd.xlane.f32.xlu0 %v1744
        %v1776 = vpop.xlane.xlu0 %1775
        %1777 = vadd.xlane.f32.xlu0 %v1746
        %v1778 = vpop.xlane.xlu0 %1777
        %v1779 = vrcp.pop %v1748
        %v1780 = vrcp.pop %v1750
        %v1781 = vrcp.pop %v1752
        %v1782 = vrcp.pop %v1754
        %v1783 = vrcp.pop %v1756
        %v1784 = vrcp.pop %v1758
        %v1785 = vrcp.pop %v1760
        %v1786 = vrcp.pop %v1762
        %v1787 = vrcp.pop %v1764
        %v1788 = vrcp.pop %v1766
        %v1789 = vrcp.pop %v1768
        %v1790 = vrcp.pop %v1770
        %v1791 = vrcp.pop %v1772
        %v1792 = vrcp.pop %v1774
        %v1793 = vrcp.pop %v1776
        %v1794 = vrcp.pop %v1778
        %v1795 = vmul.f32 %v1716, %v1779
        %v1796 = vmul.f32 %v1718, %v1780
        %v1797 = vmul.f32 %v1720, %v1781
        %v1798 = vmul.f32 %v1722, %v1782
        %v1799 = vmul.f32 %v1724, %v1783
        %v1800 = vmul.f32 %v1726, %v1784
        %v1801 = vmul.f32 %v1728, %v1785
        %v1802 = vmul.f32 %v1730, %v1786
        %v1803 = vmul.f32 %v1732, %v1787
        %v1804 = vmul.f32 %v1734, %v1788
        %v1805 = vmul.f32 %v1736, %v1789
        %v1806 = vmul.f32 %v1738, %v1790
        %v1807 = vmul.f32 %v1740, %v1791
        %v1808 = vmul.f32 %v1742, %v1792
        %v1809 = vmul.f32 %v1744, %v1793
        %v1810 = vmul.f32 %v1746, %v1794
        %1811 = vst [vmem:[%s274] sm:$0xff] %v1795
        %1812 = vst [vmem:[%s274 + $0x8] sm:$0xff] %v1796
        %1813 = vst [vmem:[%s274 + $0x10] sm:$0xff] %v1797
        %1814 = vst [vmem:[%s274 + $0x18] sm:$0xff] %v1798
        %1815 = vst [vmem:[%s274 + $0x20] sm:$0xff] %v1799
        %1816 = vst [vmem:[%s274 + $0x28] sm:$0xff] %v1800
        %1817 = vst [vmem:[%s274 + $0x30] sm:$0xff] %v1801
        %1818 = vst [vmem:[%s274 + $0x38] sm:$0xff] %v1802
        %1819 = vst [vmem:[%s274 + $0x40] sm:$0xff] %v1803
        %1820 = vst [vmem:[%s274 + $0x48] sm:$0xff] %v1804
        %1821 = vst [vmem:[%s274 + $0x50] sm:$0xff] %v1805
        %1822 = vst [vmem:[%s274 + $0x58] sm:$0xff] %v1806
        %1823 = vst [vmem:[%s274 + $0x60] sm:$0xff] %v1807
        %1824 = vst [vmem:[%s274 + $0x68] sm:$0xff] %v1808
        %1825 = vst [vmem:[%s274 + $0x70] sm:$0xff] %v1809
        %1826 = vst [vmem:[%s274 + $0x78] sm:$0xff] %v1810
        %s1827 = sand.u32 %s181, 1
        %s1828 = scalar_lea.sflag [#allocation3], %s1827
        %s1829 = sand.u32 %s181, 1
        %s1830 = smul.addr %s1829, 128
        %s1831 = scalar_lea.vmem [#allocation2], %s1830
        // Predicated region
        $region49: #{tpu_custom_call.1} parent=47 // pred_check
          %p1832 = pneg %p191
        $region50: #{tpu_custom_call.1} parent=47 // pred_check_branch
          %1834 = sbr.rel (%p1832) target = $region52
        $region51: #{tpu_custom_call.1} parent=47 // pred_region
          %s1835 = smul.u32 16, %s21
          %1837 = vsyncadd %s1828, 0
          %s1838 = smul.addr %s1835, 8
          %s1839 = scalar_lea.hbm %s7, %s1838
          %s1840 = sshll.u32 %s1831, 4
          %s1841 = int_to_ptr.vmem [resolvable:$true] %s1840
          %s1842 = sshll.u32 %s1839, 4
          %s1843 = int_to_ptr.hbm [resolvable:$true] %s1842
          %1848 = dma.vmem_to_hbm [thread:$0]  %s1841, 2048, %s1843, %s1828, 128, 128, 8
        $region52: #{tpu_custom_call.1} parent=47 // pred_fallthru
          _
      $region48: #{tpu_custom_call.1} parent=5 // pred_fallthru
        _
      %p1849 = scmp.le.s32.totalorder 2, %s16
      // Predicated region
      $region53: #{tpu_custom_call.1} parent=5 // pred_check
        %p1850 = pneg %p1849
      $region54: #{tpu_custom_call.1} parent=5 // pred_check_branch
        %1852 = sbr.rel (%p1850) target = $region56
      $region55: #{tpu_custom_call.1} parent=5 // pred_region
        %s1853 = ssub.s32 %s16, 2
        // Predicated region
        $region57: #{tpu_custom_call.1} parent=55 // pred_check
          %p1854 = pneg %p197
        $region58: #{tpu_custom_call.1} parent=55 // pred_check_branch
          %1856 = sbr.rel (%p1854) target = $region60
        $region59: #{tpu_custom_call.1} parent=55 // pred_region
          %s1857 = sand.u32 %s182, 1
          %s1858 = scalar_lea.sflag [#allocation3], %s1857
          %s1859 = sand.u32 %s182, 1
          %s1860 = smul.addr %s1859, 128
          %s1861 = scalar_lea.vmem [#allocation2], %s1860
          %1863 = dma.done %s1858, 2048
        $region60: #{tpu_custom_call.1} parent=55 // pred_fallthru
          _
      $region56: #{tpu_custom_call.1} parent=5 // pred_fallthru
        _
    $region6: #{tpu_custom_call.1} parent=1 // loop_footer
      %s20 = sadd.s32 1, %s16
    $region7: #{tpu_custom_call.1} parent=1 // loop_footer_branch
      %15 = sbr.rel target = $region3
    $region8: #{tpu_custom_call.1} parent=1 // loop_exit
      _
    %1864 = vsyncpa [#allocation3], 1
    %s1865 = scalar_lea.sflag [#allocation3], 1
    %1866 = vsyncpa %s1865, 1

</llo_original>
